<compile_context>
chip_gen: v7x
topology: tpu7x:2x2x1
jax: 0.10.0
libtpu: 0.0.40
codegen_flags: <defaults>
</compile_context>

<pallas_src>
import functools

import jax
import jax.numpy as jnp
from jax.experimental import pallas as pl
from jax.experimental.pallas import tpu as pltpu


# ----------------------------------------------------------------------------
# Fully fused EncoderLayer kernel: one batch row (1, S, D) per grid step.
# ----------------------------------------------------------------------------
def _encoder_layer_kernel(
    x_ref, mask_ref,
    g1_ref, be1_ref,
    wqkv_ref, bqkv_ref, wo_ref, bo_ref,
    g2_ref, be2_ref,
    w1_ref, b1_ref, w2_ref, b2_ref,
    o_ref,
    ctx_ref,
    *, heads, eps):
    x = x_ref[0].astype(jnp.float32)                  # (S, D), lane axis = D
    S, D = x.shape
    dh = D // heads
    scale = jnp.float32(1.0 / (dh ** 0.5))

    # Additive mask bias computed once (0 keep / -1e9 masked), shape (1, S).
    mask = mask_ref[0]                                # (1, S)
    mask_bias = jnp.where(mask > 0, 0.0, -1e9).astype(jnp.float32)

    # ---------------- sublayer 0: x + MHA(LN(x)) ----------------------------
    mean = jnp.mean(x, axis=-1, keepdims=True)
    var = jnp.mean((x - mean) ** 2, axis=-1, keepdims=True)
    xn = (x - mean) * jax.lax.rsqrt(var + eps)
    xn = xn * g1_ref[...] + be1_ref[...]              # gamma/beta (1, D)

    # Fused QKV projection: bf16 operands, f32 accumulation, f32 bias add.
    qkv = jnp.dot(xn.astype(jnp.bfloat16), wqkv_ref[...],
                  preferred_element_type=jnp.float32) + bqkv_ref[...]
    q = (qkv[:, 0:D] * scale).astype(jnp.bfloat16)    # scale folded into q once
    k = qkv[:, D:2 * D].astype(jnp.bfloat16)
    v = qkv[:, 2 * D:3 * D].astype(jnp.bfloat16)

    # Per-head attention (heads is static -> unrolled).  Each head's PV result
    # is written into its static slice of the lane-dense (S, D) VMEM scratch.
    for h in range(heads):
        sl = slice(h * dh, (h + 1) * dh)
        # scores = qh @ kh.T (contract the head dim directly, no transpose)
        s = jax.lax.dot_general(
            q[:, sl], k[:, sl], (((1,), (1,)), ((), ())),
            preferred_element_type=jnp.float32)       # (S, S) f32
        s = s + mask_bias                             # broadcast over query rows
        s = s - jnp.max(s, axis=-1, keepdims=True)
        p = jnp.exp(s)
        p = p * pl.reciprocal(jnp.sum(p, axis=-1, keepdims=True), approx=True)
        ctx_ref[:, sl] = jnp.dot(p.astype(jnp.bfloat16), v[:, sl],
                                 preferred_element_type=jnp.float32)

    attn_out = jnp.dot(ctx_ref[...].astype(jnp.bfloat16), wo_ref[...],
                       preferred_element_type=jnp.float32) + bo_ref[...]
    x1 = x + attn_out                                 # fused residual add (f32)
    # TODO(synk): dropout is identity at inference; training dropout omitted.

    # ---------------- sublayer 1: x + FFN(LN(x)) -----------------------------
    mean = jnp.mean(x1, axis=-1, keepdims=True)
    var = jnp.mean((x1 - mean) ** 2, axis=-1, keepdims=True)
    xn2 = (x1 - mean) * jax.lax.rsqrt(var + eps)
    xn2 = xn2 * g2_ref[...] + be2_ref[...]

    # d_ff hidden activation never leaves VMEM.
    hdn = jnp.dot(xn2.astype(jnp.bfloat16), w1_ref[...],
                  preferred_element_type=jnp.float32) + b1_ref[...]
    hdn = jnp.maximum(hdn, 0.0)                       # ReLU epilogue (f32)
    ffn_out = jnp.dot(hdn.astype(jnp.bfloat16), w2_ref[...],
                      preferred_element_type=jnp.float32) + b2_ref[...]

    o_ref[0] = (x1 + ffn_out).astype(o_ref.dtype)     # fused residual, lane-dense


# ----------------------------------------------------------------------------
# Wrapper: single pallas_call, grid over batch rows (parallel).
# ----------------------------------------------------------------------------
def encoder_layer(x, mask, params, eps=1e-6):
    B, S, D = x.shape
    H = params["heads"]
    DFF = params["w1"].shape[1]

    # Host-side weight prep: fused QKV and bf16 MXU operands. Biases stay f32
    # (added after the f32 accumulation).
    wqkv = jnp.concatenate(
        [params["wq"], params["wk"], params["wv"]], axis=1).astype(jnp.bfloat16)
    bqkv = jnp.concatenate(
        [params["bq"], params["bk"], params["bv"]]).reshape(1, 3 * D)
    wo = params["wo"].astype(jnp.bfloat16)
    w1 = params["w1"].astype(jnp.bfloat16)
    w2 = params["w2"].astype(jnp.bfloat16)

    kern = functools.partial(_encoder_layer_kernel, heads=H, eps=eps)

    # Weights / biases: full-array, single-buffered, VMEM-resident (no grid
    # blocking -> no per-step re-DMA, no double-buffer allocation).
    vmem = pl.BlockSpec(memory_space=pltpu.MemorySpace.VMEM)
    row3 = lambda b: (b, 0, 0)

    # Explicit VMEM budget (defaults: 16 MiB v5e / 32 MiB v6e-v7x).
    weights_b = (D * 3 * D + D * D + D * DFF + DFF * D) * 2          # bf16
    biases_b = (3 * D + 4 * D + DFF + 4 * D) * 4                     # f32
    act_b = 4 * (S * D * 4) + 2 * (S * 4)                            # x/out dbl-buf + mask
    interm_b = (3 * S * D + 2 * S * S + S * DFF + 2 * S * D) * 4     # qkv/scores/hidden/ctx
    vmem_limit = int(min(64 * 1024 * 1024,
                         max(16 * 1024 * 1024,
                             2 * (weights_b + biases_b + act_b + interm_b))))

    return pl.pallas_call(
        kern,
        out_shape=jax.ShapeDtypeStruct((B, S, D), x.dtype),
        grid=(B,),
        in_specs=[
            pl.BlockSpec((1, S, D), row3),            # x
            pl.BlockSpec((1, 1, S), row3),            # mask
            vmem, vmem,                               # ln1 gamma / beta
            vmem, vmem,                               # wqkv, bqkv
            vmem, vmem,                               # wo, bo
            vmem, vmem,                               # ln2 gamma / beta
            vmem, vmem,                               # w1, b1
            vmem, vmem,                               # w2, b2
        ],
        out_specs=pl.BlockSpec((1, S, D), row3),
        scratch_shapes=[pltpu.VMEM((S, D), jnp.float32)],   # per-row context
        compiler_params=pltpu.CompilerParams(
            dimension_semantics=("parallel",),
            vmem_limit_bytes=vmem_limit),
    )(
        x, mask,
        params["ln1_g"].reshape(1, D), params["ln1_b"].reshape(1, D),
        wqkv, bqkv,
        wo, params["bo"].reshape(1, D),
        params["ln2_g"].reshape(1, D), params["ln2_b"].reshape(1, D),
        w1, params["b1"].reshape(1, DFF),
        w2, params["b2"].reshape(1, D),
    )


# ----------------------------------------------------------------------------
# Pure-JAX f32 reference (numerical sanity check).
# ----------------------------------------------------------------------------
def encoder_layer_reference(x, mask, params, eps=1e-6):
    def ln(t, g, b):
        m = jnp.mean(t, -1, keepdims=True)
        v = jnp.mean((t - m) ** 2, -1, keepdims=True)
        return (t - m) / jnp.sqrt(v + eps) * g + b

    B, S, D = x.shape
    H = params["heads"]
    dh = D // H

    xn = ln(x, params["ln1_g"], params["ln1_b"])
    q = (xn @ params["wq"] + params["bq"]).reshape(B, S, H, dh).transpose(0, 2, 1, 3)
    k = (xn @ params["wk"] + params["bk"]).reshape(B, S, H, dh).transpose(0, 2, 1, 3)
    v = (xn @ params["wv"] + params["bv"]).reshape(B, S, H, dh).transpose(0, 2, 1, 3)
    s = jnp.einsum("bhqd,bhkd->bhqk", q, k) / jnp.sqrt(jnp.float32(dh))
    s = jnp.where(mask[:, None, :, :] > 0, s, -1e9)
    p = jax.nn.softmax(s, axis=-1)
    ctx = jnp.einsum("bhqk,bhkd->bhqd", p, v).transpose(0, 2, 1, 3).reshape(B, S, D)
    x = x + ctx @ params["wo"] + params["bo"]

    xn = ln(x, params["ln2_g"], params["ln2_b"])
    h = jax.nn.relu(xn @ params["w1"] + params["b1"])
    return x + h @ params["w2"] + params["b2"]


# ----------------------------------------------------------------------------
# Deterministic parameter construction.
# ----------------------------------------------------------------------------
def make_params(key, d_model, heads, d_ff):
    ks = jax.random.split(key, 8)

    def init(k, shape, scale=0.05):
        return (scale * jax.random.normal(k, shape)).astype(jnp.float32)

    return {
        "heads": heads,
        "ln1_g": jnp.ones((d_model,), jnp.float32),
        "ln1_b": jnp.zeros((d_model,), jnp.float32),
        "ln2_g": jnp.ones((d_model,), jnp.float32),
        "ln2_b": jnp.zeros((d_model,), jnp.float32),
        "wq": init(ks[0], (d_model, d_model)), "bq": jnp.zeros((d_model,), jnp.float32),
        "wk": init(ks[1], (d_model, d_model)), "bk": jnp.zeros((d_model,), jnp.float32),
        "wv": init(ks[2], (d_model, d_model)), "bv": jnp.zeros((d_model,), jnp.float32),
        "wo": init(ks[3], (d_model, d_model)), "bo": jnp.zeros((d_model,), jnp.float32),
        "w1": init(ks[4], (d_model, d_ff)),    "b1": jnp.zeros((d_ff,), jnp.float32),
        "w2": init(ks[5], (d_ff, d_model)),    "b2": jnp.zeros((d_model,), jnp.float32),
    }


if __name__ == "__main__":
    # Small but layout-representative shapes: D, DFF multiples of 128, S of 8.
    B, S, D, H, DFF = 2, 8, 128, 4, 256
    key = jax.random.PRNGKey(0)
    kx, kp = jax.random.split(key)

    x = jax.random.normal(kx, (B, S, D), dtype=jnp.float32)
    # mask: 1.0 = attend, 0.0 = masked; mask out the last two keys of batch 1.
    mask = jnp.ones((B, 1, S), dtype=jnp.float32)
    mask = mask.at[1, 0, -2:].set(0.0)

    params = make_params(kp, D, H, DFF)

    out = encoder_layer(x, mask, params)
    jax.block_until_ready(out)

    assert out.shape == (B, S, D) and out.dtype == jnp.float32
    ref = encoder_layer_reference(x, mask, params)
    max_err = float(jnp.max(jnp.abs(out - ref)))
    assert jnp.allclose(out, ref, atol=3e-2, rtol=1e-1), \
        f"mismatch vs JAX reference (max abs err {max_err})"
    print("KERNEL_OK")
</pallas_src>

<mosaic_0001>
module attributes {stable_mosaic.version = 11 : i64} {
  func.func @_encoder_layer_kernel(%arg0: i32, %arg1: memref<1x8x128xf32, #tpu.memory_space<vmem>>, %arg2: memref<1x1x8xf32, #tpu.memory_space<vmem>>, %arg3: memref<1x128xf32, #tpu.memory_space<vmem>>, %arg4: memref<1x128xf32, #tpu.memory_space<vmem>>, %arg5: memref<128x384xbf16, #tpu.memory_space<vmem>>, %arg6: memref<1x384xf32, #tpu.memory_space<vmem>>, %arg7: memref<128x128xbf16, #tpu.memory_space<vmem>>, %arg8: memref<1x128xf32, #tpu.memory_space<vmem>>, %arg9: memref<1x128xf32, #tpu.memory_space<vmem>>, %arg10: memref<1x128xf32, #tpu.memory_space<vmem>>, %arg11: memref<128x256xbf16, #tpu.memory_space<vmem>>, %arg12: memref<1x256xf32, #tpu.memory_space<vmem>>, %arg13: memref<256x128xbf16, #tpu.memory_space<vmem>>, %arg14: memref<1x128xf32, #tpu.memory_space<vmem>>, %arg15: memref<1x8x128xf32, #tpu.memory_space<vmem>>, %arg16: memref<8x128xf32, #tpu.memory_space<vmem>>) attributes {dimension_semantics = [#tpu.dimension_semantics<parallel>], iteration_bounds = array<i64: 2>, scalar_prefetch = 0 : i64, scratch_operands = 1 : i64, tpu.core_type = #tpu.core_type<tc>, window_params = [{transform_indices = @transform_0, window_bounds = array<i64: 1, 8, 128>}, {transform_indices = @transform_1, window_bounds = array<i64: 1, 1, 8>}, {pipeline_mode = #tpu.pipeline_mode<synchronous>, transform_indices = @transform_2, window_bounds = array<i64: 1, 128>}, {pipeline_mode = #tpu.pipeline_mode<synchronous>, transform_indices = @transform_3, window_bounds = array<i64: 1, 128>}, {pipeline_mode = #tpu.pipeline_mode<synchronous>, transform_indices = @transform_4, window_bounds = array<i64: 128, 384>}, {pipeline_mode = #tpu.pipeline_mode<synchronous>, transform_indices = @transform_5, window_bounds = array<i64: 1, 384>}, {pipeline_mode = #tpu.pipeline_mode<synchronous>, transform_indices = @transform_6, window_bounds = array<i64: 128, 128>}, {pipeline_mode = #tpu.pipeline_mode<synchronous>, transform_indices = @transform_7, window_bounds = array<i64: 1, 128>}, {pipeline_mode = #tpu.pipeline_mode<synchronous>, transform_indices = @transform_8, window_bounds = array<i64: 1, 128>}, {pipeline_mode = #tpu.pipeline_mode<synchronous>, transform_indices = @transform_9, window_bounds = array<i64: 1, 128>}, {pipeline_mode = #tpu.pipeline_mode<synchronous>, transform_indices = @transform_10, window_bounds = array<i64: 128, 256>}, {pipeline_mode = #tpu.pipeline_mode<synchronous>, transform_indices = @transform_11, window_bounds = array<i64: 1, 256>}, {pipeline_mode = #tpu.pipeline_mode<synchronous>, transform_indices = @transform_12, window_bounds = array<i64: 256, 128>}, {pipeline_mode = #tpu.pipeline_mode<synchronous>, transform_indices = @transform_13, window_bounds = array<i64: 1, 128>}, {transform_indices = @transform_14, window_bounds = array<i64: 1, 8, 128>}]} {
    %c0 = arith.constant 0 : index
    %c0_0 = arith.constant 0 : index
    %c0_1 = arith.constant 0 : index
    %0 = vector.load %arg1[%c0, %c0_0, %c0_1] : memref<1x8x128xf32, #tpu.memory_space<vmem>>, vector<1x8x128xf32>
    %1 = vector.shape_cast %0 : vector<1x8x128xf32> to vector<8x128xf32>
    %c0_2 = arith.constant 0 : index
    %c0_3 = arith.constant 0 : index
    %c0_4 = arith.constant 0 : index
    %2 = vector.load %arg2[%c0_2, %c0_3, %c0_4] : memref<1x1x8xf32, #tpu.memory_space<vmem>>, vector<1x1x8xf32>
    %3 = vector.shape_cast %2 : vector<1x1x8xf32> to vector<1x8xf32>
    %cst = arith.constant 0.000000e+00 : f32
    %4 = vector.broadcast %cst : f32 to vector<1x8xf32>
    %5 = arith.cmpf ogt, %3, %4 : vector<1x8xf32>
    %cst_5 = arith.constant 0.000000e+00 : f32
    %cst_6 = arith.constant -1.000000e+09 : f32
    %6 = vector.broadcast %cst_5 : f32 to vector<1x8xf32>
    %7 = vector.broadcast %cst_6 : f32 to vector<1x8xf32>
    %8 = arith.select %5, %6, %7 : vector<1x8xi1>, vector<1x8xf32>
    %cst_7 = arith.constant dense<0.000000e+00> : vector<8xf32>
    %9 = vector.multi_reduction <add>, %1, %cst_7 [1] : vector<8x128xf32> to vector<8xf32>
    %10 = vector.shape_cast %9 : vector<8xf32> to vector<8x1xf32>
    %cst_8 = arith.constant 1.280000e+02 : f32
    %11 = vector.broadcast %cst_8 : f32 to vector<8x1xf32>
    %12 = arith.divf %10, %11 : vector<8x1xf32>
    %13 = vector.broadcast %12 : vector<8x1xf32> to vector<8x128xf32>
    %14 = arith.subf %1, %13 : vector<8x128xf32>
    %15 = arith.mulf %14, %14 : vector<8x128xf32>
    %cst_9 = arith.constant dense<0.000000e+00> : vector<8xf32>
    %16 = vector.multi_reduction <add>, %15, %cst_9 [1] : vector<8x128xf32> to vector<8xf32>
    %17 = vector.shape_cast %16 : vector<8xf32> to vector<8x1xf32>
    %cst_10 = arith.constant 1.280000e+02 : f32
    %18 = vector.broadcast %cst_10 : f32 to vector<8x1xf32>
    %19 = arith.divf %17, %18 : vector<8x1xf32>
    %20 = vector.broadcast %12 : vector<8x1xf32> to vector<8x128xf32>
    %21 = arith.subf %1, %20 : vector<8x128xf32>
    %cst_11 = arith.constant 9.99999997E-7 : f32
    %22 = vector.broadcast %cst_11 : f32 to vector<8x1xf32>
    %23 = arith.addf %19, %22 : vector<8x1xf32>
    %24 = math.rsqrt %23 : vector<8x1xf32>
    %25 = vector.broadcast %24 : vector<8x1xf32> to vector<8x128xf32>
    %26 = arith.mulf %21, %25 : vector<8x128xf32>
    %c0_12 = arith.constant 0 : index
    %c0_13 = arith.constant 0 : index
    %27 = vector.load %arg3[%c0_12, %c0_13] : memref<1x128xf32, #tpu.memory_space<vmem>>, vector<1x128xf32>
    %28 = vector.broadcast %27 : vector<1x128xf32> to vector<8x128xf32>
    %29 = arith.mulf %26, %28 : vector<8x128xf32>
    %c0_14 = arith.constant 0 : index
    %c0_15 = arith.constant 0 : index
    %30 = vector.load %arg4[%c0_14, %c0_15] : memref<1x128xf32, #tpu.memory_space<vmem>>, vector<1x128xf32>
    %31 = vector.broadcast %30 : vector<1x128xf32> to vector<8x128xf32>
    %32 = arith.addf %29, %31 : vector<8x128xf32>
    %33 = arith.truncf %32 : vector<8x128xf32> to vector<8x128xbf16>
    %c0_16 = arith.constant 0 : index
    %c0_17 = arith.constant 0 : index
    %34 = vector.load %arg5[%c0_16, %c0_17] : memref<128x384xbf16, #tpu.memory_space<vmem>>, vector<128x384xbf16>
    %cst_18 = arith.constant dense<0.000000e+00> : vector<8x384xf32>
    %35 = tpu.matmul %33, %34, %cst_18 {dimension_numbers = #tpu.dot_dimension_numbers<[1], [0], [0], [1], [0, 0, 1, 1], [], []>} : vector<8x128xbf16>, vector<128x384xbf16>, vector<8x384xf32> -> vector<8x384xf32>
    %c0_19 = arith.constant 0 : index
    %c0_20 = arith.constant 0 : index
    %36 = vector.load %arg6[%c0_19, %c0_20] : memref<1x384xf32, #tpu.memory_space<vmem>>, vector<1x384xf32>
    %37 = vector.broadcast %36 : vector<1x384xf32> to vector<8x384xf32>
    %38 = arith.addf %35, %37 : vector<8x384xf32>
    %39 = vector.extract_strided_slice %38 {offsets = [0, 0], sizes = [8, 128], strides = [1, 1]} : vector<8x384xf32> to vector<8x128xf32>
    %cst_21 = arith.constant 0.176776692 : f32
    %40 = vector.broadcast %cst_21 : f32 to vector<8x128xf32>
    %41 = arith.mulf %39, %40 : vector<8x128xf32>
    %42 = arith.truncf %41 : vector<8x128xf32> to vector<8x128xbf16>
    %43 = vector.extract_strided_slice %38 {offsets = [0, 128], sizes = [8, 128], strides = [1, 1]} : vector<8x384xf32> to vector<8x128xf32>
    %44 = arith.truncf %43 : vector<8x128xf32> to vector<8x128xbf16>
    %45 = vector.extract_strided_slice %38 {offsets = [0, 256], sizes = [8, 128], strides = [1, 1]} : vector<8x384xf32> to vector<8x128xf32>
    %46 = arith.truncf %45 : vector<8x128xf32> to vector<8x128xbf16>
    %47 = vector.extract_strided_slice %42 {offsets = [0, 0], sizes = [8, 32], strides = [1, 1]} : vector<8x128xbf16> to vector<8x32xbf16>
    %48 = vector.extract_strided_slice %44 {offsets = [0, 0], sizes = [8, 32], strides = [1, 1]} : vector<8x128xbf16> to vector<8x32xbf16>
    %cst_22 = arith.constant dense<0.000000e+00> : vector<8x8xf32>
    %49 = tpu.matmul %47, %48, %cst_22 {dimension_numbers = #tpu.dot_dimension_numbers<[1], [1], [0], [0], [0, 0, 1, 0], [], []>} : vector<8x32xbf16>, vector<8x32xbf16>, vector<8x8xf32> -> vector<8x8xf32>
    %50 = vector.broadcast %8 : vector<1x8xf32> to vector<8x8xf32>
    %51 = arith.addf %49, %50 : vector<8x8xf32>
    %cst_23 = arith.constant dense<0xFF800000> : vector<8xf32>
    %52 = vector.multi_reduction <maximumf>, %51, %cst_23 [1] : vector<8x8xf32> to vector<8xf32>
    %53 = vector.shape_cast %52 : vector<8xf32> to vector<8x1xf32>
    %54 = vector.broadcast %53 : vector<8x1xf32> to vector<8x8xf32>
    %55 = arith.subf %51, %54 : vector<8x8xf32>
    %56 = math.exp %55 : vector<8x8xf32>
    %cst_24 = arith.constant dense<0.000000e+00> : vector<8xf32>
    %57 = vector.multi_reduction <add>, %56, %cst_24 [1] : vector<8x8xf32> to vector<8xf32>
    %58 = vector.shape_cast %57 : vector<8xf32> to vector<8x1xf32>
    %59 = tpu.reciprocal %58 {approx = true} : vector<8x1xf32> -> vector<8x1xf32>
    %60 = vector.broadcast %59 : vector<8x1xf32> to vector<8x8xf32>
    %61 = arith.mulf %56, %60 : vector<8x8xf32>
    %62 = arith.truncf %61 : vector<8x8xf32> to vector<8x8xbf16>
    %63 = vector.extract_strided_slice %46 {offsets = [0, 0], sizes = [8, 32], strides = [1, 1]} : vector<8x128xbf16> to vector<8x32xbf16>
    %cst_25 = arith.constant dense<0.000000e+00> : vector<8x32xf32>
    %64 = tpu.matmul %62, %63, %cst_25 {dimension_numbers = #tpu.dot_dimension_numbers<[1], [0], [0], [1], [0, 0, 1, 1], [], []>} : vector<8x8xbf16>, vector<8x32xbf16>, vector<8x32xf32> -> vector<8x32xf32>
    %c0_26 = arith.constant 0 : index
    %c0_27 = arith.constant 0 : index
    %65 = vector.load %arg16[%c0_26, %c0_27] : memref<8x128xf32, #tpu.memory_space<vmem>>, vector<8x32xf32>
    tpu.vector_store %arg16[%c0_26, %c0_27], %64 {strides = array<i32>} : memref<8x128xf32, #tpu.memory_space<vmem>>, vector<8x32xf32>,
    %66 = vector.extract_strided_slice %42 {offsets = [0, 32], sizes = [8, 32], strides = [1, 1]} : vector<8x128xbf16> to vector<8x32xbf16>
    %67 = vector.extract_strided_slice %44 {offsets = [0, 32], sizes = [8, 32], strides = [1, 1]} : vector<8x128xbf16> to vector<8x32xbf16>
    %cst_28 = arith.constant dense<0.000000e+00> : vector<8x8xf32>
    %68 = tpu.matmul %66, %67, %cst_28 {dimension_numbers = #tpu.dot_dimension_numbers<[1], [1], [0], [0], [0, 0, 1, 0], [], []>} : vector<8x32xbf16>, vector<8x32xbf16>, vector<8x8xf32> -> vector<8x8xf32>
    %69 = vector.broadcast %8 : vector<1x8xf32> to vector<8x8xf32>
    %70 = arith.addf %68, %69 : vector<8x8xf32>
    %cst_29 = arith.constant dense<0xFF800000> : vector<8xf32>
    %71 = vector.multi_reduction <maximumf>, %70, %cst_29 [1] : vector<8x8xf32> to vector<8xf32>
    %72 = vector.shape_cast %71 : vector<8xf32> to vector<8x1xf32>
    %73 = vector.broadcast %72 : vector<8x1xf32> to vector<8x8xf32>
    %74 = arith.subf %70, %73 : vector<8x8xf32>
    %75 = math.exp %74 : vector<8x8xf32>
    %cst_30 = arith.constant dense<0.000000e+00> : vector<8xf32>
    %76 = vector.multi_reduction <add>, %75, %cst_30 [1] : vector<8x8xf32> to vector<8xf32>
    %77 = vector.shape_cast %76 : vector<8xf32> to vector<8x1xf32>
    %78 = tpu.reciprocal %77 {approx = true} : vector<8x1xf32> -> vector<8x1xf32>
    %79 = vector.broadcast %78 : vector<8x1xf32> to vector<8x8xf32>
    %80 = arith.mulf %75, %79 : vector<8x8xf32>
    %81 = arith.truncf %80 : vector<8x8xf32> to vector<8x8xbf16>
    %82 = vector.extract_strided_slice %46 {offsets = [0, 32], sizes = [8, 32], strides = [1, 1]} : vector<8x128xbf16> to vector<8x32xbf16>
    %cst_31 = arith.constant dense<0.000000e+00> : vector<8x32xf32>
    %83 = tpu.matmul %81, %82, %cst_31 {dimension_numbers = #tpu.dot_dimension_numbers<[1], [0], [0], [1], [0, 0, 1, 1], [], []>} : vector<8x8xbf16>, vector<8x32xbf16>, vector<8x32xf32> -> vector<8x32xf32>
    %c0_32 = arith.constant 0 : index
    %c32 = arith.constant 32 : index
    %84 = vector.load %arg16[%c0_32, %c32] : memref<8x128xf32, #tpu.memory_space<vmem>>, vector<8x32xf32>
    tpu.vector_store %arg16[%c0_32, %c32], %83 {strides = array<i32>} : memref<8x128xf32, #tpu.memory_space<vmem>>, vector<8x32xf32>,
    %85 = vector.extract_strided_slice %42 {offsets = [0, 64], sizes = [8, 32], strides = [1, 1]} : vector<8x128xbf16> to vector<8x32xbf16>
    %86 = vector.extract_strided_slice %44 {offsets = [0, 64], sizes = [8, 32], strides = [1, 1]} : vector<8x128xbf16> to vector<8x32xbf16>
    %cst_33 = arith.constant dense<0.000000e+00> : vector<8x8xf32>
    %87 = tpu.matmul %85, %86, %cst_33 {dimension_numbers = #tpu.dot_dimension_numbers<[1], [1], [0], [0], [0, 0, 1, 0], [], []>} : vector<8x32xbf16>, vector<8x32xbf16>, vector<8x8xf32> -> vector<8x8xf32>
    %88 = vector.broadcast %8 : vector<1x8xf32> to vector<8x8xf32>
    %89 = arith.addf %87, %88 : vector<8x8xf32>
    %cst_34 = arith.constant dense<0xFF800000> : vector<8xf32>
    %90 = vector.multi_reduction <maximumf>, %89, %cst_34 [1] : vector<8x8xf32> to vector<8xf32>
    %91 = vector.shape_cast %90 : vector<8xf32> to vector<8x1xf32>
    %92 = vector.broadcast %91 : vector<8x1xf32> to vector<8x8xf32>
    %93 = arith.subf %89, %92 : vector<8x8xf32>
    %94 = math.exp %93 : vector<8x8xf32>
    %cst_35 = arith.constant dense<0.000000e+00> : vector<8xf32>
    %95 = vector.multi_reduction <add>, %94, %cst_35 [1] : vector<8x8xf32> to vector<8xf32>
    %96 = vector.shape_cast %95 : vector<8xf32> to vector<8x1xf32>
    %97 = tpu.reciprocal %96 {approx = true} : vector<8x1xf32> -> vector<8x1xf32>
    %98 = vector.broadcast %97 : vector<8x1xf32> to vector<8x8xf32>
    %99 = arith.mulf %94, %98 : vector<8x8xf32>
    %100 = arith.truncf %99 : vector<8x8xf32> to vector<8x8xbf16>
    %101 = vector.extract_strided_slice %46 {offsets = [0, 64], sizes = [8, 32], strides = [1, 1]} : vector<8x128xbf16> to vector<8x32xbf16>
    %cst_36 = arith.constant dense<0.000000e+00> : vector<8x32xf32>
    %102 = tpu.matmul %100, %101, %cst_36 {dimension_numbers = #tpu.dot_dimension_numbers<[1], [0], [0], [1], [0, 0, 1, 1], [], []>} : vector<8x8xbf16>, vector<8x32xbf16>, vector<8x32xf32> -> vector<8x32xf32>
    %c0_37 = arith.constant 0 : index
    %c64 = arith.constant 64 : index
    %103 = vector.load %arg16[%c0_37, %c64] : memref<8x128xf32, #tpu.memory_space<vmem>>, vector<8x32xf32>
    tpu.vector_store %arg16[%c0_37, %c64], %102 {strides = array<i32>} : memref<8x128xf32, #tpu.memory_space<vmem>>, vector<8x32xf32>,
    %104 = vector.extract_strided_slice %42 {offsets = [0, 96], sizes = [8, 32], strides = [1, 1]} : vector<8x128xbf16> to vector<8x32xbf16>
    %105 = vector.extract_strided_slice %44 {offsets = [0, 96], sizes = [8, 32], strides = [1, 1]} : vector<8x128xbf16> to vector<8x32xbf16>
    %cst_38 = arith.constant dense<0.000000e+00> : vector<8x8xf32>
    %106 = tpu.matmul %104, %105, %cst_38 {dimension_numbers = #tpu.dot_dimension_numbers<[1], [1], [0], [0], [0, 0, 1, 0], [], []>} : vector<8x32xbf16>, vector<8x32xbf16>, vector<8x8xf32> -> vector<8x8xf32>
    %107 = vector.broadcast %8 : vector<1x8xf32> to vector<8x8xf32>
    %108 = arith.addf %106, %107 : vector<8x8xf32>
    %cst_39 = arith.constant dense<0xFF800000> : vector<8xf32>
    %109 = vector.multi_reduction <maximumf>, %108, %cst_39 [1] : vector<8x8xf32> to vector<8xf32>
    %110 = vector.shape_cast %109 : vector<8xf32> to vector<8x1xf32>
    %111 = vector.broadcast %110 : vector<8x1xf32> to vector<8x8xf32>
    %112 = arith.subf %108, %111 : vector<8x8xf32>
    %113 = math.exp %112 : vector<8x8xf32>
    %cst_40 = arith.constant dense<0.000000e+00> : vector<8xf32>
    %114 = vector.multi_reduction <add>, %113, %cst_40 [1] : vector<8x8xf32> to vector<8xf32>
    %115 = vector.shape_cast %114 : vector<8xf32> to vector<8x1xf32>
    %116 = tpu.reciprocal %115 {approx = true} : vector<8x1xf32> -> vector<8x1xf32>
    %117 = vector.broadcast %116 : vector<8x1xf32> to vector<8x8xf32>
    %118 = arith.mulf %113, %117 : vector<8x8xf32>
    %119 = arith.truncf %118 : vector<8x8xf32> to vector<8x8xbf16>
    %120 = vector.extract_strided_slice %46 {offsets = [0, 96], sizes = [8, 32], strides = [1, 1]} : vector<8x128xbf16> to vector<8x32xbf16>
    %cst_41 = arith.constant dense<0.000000e+00> : vector<8x32xf32>
    %121 = tpu.matmul %119, %120, %cst_41 {dimension_numbers = #tpu.dot_dimension_numbers<[1], [0], [0], [1], [0, 0, 1, 1], [], []>} : vector<8x8xbf16>, vector<8x32xbf16>, vector<8x32xf32> -> vector<8x32xf32>
    %c0_42 = arith.constant 0 : index
    %c96 = arith.constant 96 : index
    %122 = vector.load %arg16[%c0_42, %c96] : memref<8x128xf32, #tpu.memory_space<vmem>>, vector<8x32xf32>
    tpu.vector_store %arg16[%c0_42, %c96], %121 {strides = array<i32>} : memref<8x128xf32, #tpu.memory_space<vmem>>, vector<8x32xf32>,
    %c0_43 = arith.constant 0 : index
    %c0_44 = arith.constant 0 : index
    %123 = vector.load %arg16[%c0_43, %c0_44] : memref<8x128xf32, #tpu.memory_space<vmem>>, vector<8x128xf32>
    %124 = arith.truncf %123 : vector<8x128xf32> to vector<8x128xbf16>
    %c0_45 = arith.constant 0 : index
    %c0_46 = arith.constant 0 : index
    %125 = vector.load %arg7[%c0_45, %c0_46] : memref<128x128xbf16, #tpu.memory_space<vmem>>, vector<128x128xbf16>
    %cst_47 = arith.constant dense<0.000000e+00> : vector<8x128xf32>
    %126 = tpu.matmul %124, %125, %cst_47 {dimension_numbers = #tpu.dot_dimension_numbers<[1], [0], [0], [1], [0, 0, 1, 1], [], []>} : vector<8x128xbf16>, vector<128x128xbf16>, vector<8x128xf32> -> vector<8x128xf32>
    %c0_48 = arith.constant 0 : index
    %c0_49 = arith.constant 0 : index
    %127 = vector.load %arg8[%c0_48, %c0_49] : memref<1x128xf32, #tpu.memory_space<vmem>>, vector<1x128xf32>
    %128 = vector.broadcast %127 : vector<1x128xf32> to vector<8x128xf32>
    %129 = arith.addf %126, %128 : vector<8x128xf32>
    %130 = arith.addf %1, %129 : vector<8x128xf32>
    %cst_50 = arith.constant dense<0.000000e+00> : vector<8xf32>
    %131 = vector.multi_reduction <add>, %130, %cst_50 [1] : vector<8x128xf32> to vector<8xf32>
    %132 = vector.shape_cast %131 : vector<8xf32> to vector<8x1xf32>
    %cst_51 = arith.constant 1.280000e+02 : f32
    %133 = vector.broadcast %cst_51 : f32 to vector<8x1xf32>
    %134 = arith.divf %132, %133 : vector<8x1xf32>
    %135 = vector.broadcast %134 : vector<8x1xf32> to vector<8x128xf32>
    %136 = arith.subf %130, %135 : vector<8x128xf32>
    %137 = arith.mulf %136, %136 : vector<8x128xf32>
    %cst_52 = arith.constant dense<0.000000e+00> : vector<8xf32>
    %138 = vector.multi_reduction <add>, %137, %cst_52 [1] : vector<8x128xf32> to vector<8xf32>
    %139 = vector.shape_cast %138 : vector<8xf32> to vector<8x1xf32>
    %cst_53 = arith.constant 1.280000e+02 : f32
    %140 = vector.broadcast %cst_53 : f32 to vector<8x1xf32>
    %141 = arith.divf %139, %140 : vector<8x1xf32>
    %142 = vector.broadcast %134 : vector<8x1xf32> to vector<8x128xf32>
    %143 = arith.subf %130, %142 : vector<8x128xf32>
    %cst_54 = arith.constant 9.99999997E-7 : f32
    %144 = vector.broadcast %cst_54 : f32 to vector<8x1xf32>
    %145 = arith.addf %141, %144 : vector<8x1xf32>
    %146 = math.rsqrt %145 : vector<8x1xf32>
    %147 = vector.broadcast %146 : vector<8x1xf32> to vector<8x128xf32>
    %148 = arith.mulf %143, %147 : vector<8x128xf32>
    %c0_55 = arith.constant 0 : index
    %c0_56 = arith.constant 0 : index
    %149 = vector.load %arg9[%c0_55, %c0_56] : memref<1x128xf32, #tpu.memory_space<vmem>>, vector<1x128xf32>
    %150 = vector.broadcast %149 : vector<1x128xf32> to vector<8x128xf32>
    %151 = arith.mulf %148, %150 : vector<8x128xf32>
    %c0_57 = arith.constant 0 : index
    %c0_58 = arith.constant 0 : index
    %152 = vector.load %arg10[%c0_57, %c0_58] : memref<1x128xf32, #tpu.memory_space<vmem>>, vector<1x128xf32>
    %153 = vector.broadcast %152 : vector<1x128xf32> to vector<8x128xf32>
    %154 = arith.addf %151, %153 : vector<8x128xf32>
    %155 = arith.truncf %154 : vector<8x128xf32> to vector<8x128xbf16>
    %c0_59 = arith.constant 0 : index
    %c0_60 = arith.constant 0 : index
    %156 = vector.load %arg11[%c0_59, %c0_60] : memref<128x256xbf16, #tpu.memory_space<vmem>>, vector<128x256xbf16>
    %cst_61 = arith.constant dense<0.000000e+00> : vector<8x256xf32>
    %157 = tpu.matmul %155, %156, %cst_61 {dimension_numbers = #tpu.dot_dimension_numbers<[1], [0], [0], [1], [0, 0, 1, 1], [], []>} : vector<8x128xbf16>, vector<128x256xbf16>, vector<8x256xf32> -> vector<8x256xf32>
    %c0_62 = arith.constant 0 : index
    %c0_63 = arith.constant 0 : index
    %158 = vector.load %arg12[%c0_62, %c0_63] : memref<1x256xf32, #tpu.memory_space<vmem>>, vector<1x256xf32>
    %159 = vector.broadcast %158 : vector<1x256xf32> to vector<8x256xf32>
    %160 = arith.addf %157, %159 : vector<8x256xf32>
    %cst_64 = arith.constant 0.000000e+00 : f32
    %161 = vector.broadcast %cst_64 : f32 to vector<8x256xf32>
    %162 = arith.maximumf %160, %161 : vector<8x256xf32>
    %163 = arith.truncf %162 : vector<8x256xf32> to vector<8x256xbf16>
    %c0_65 = arith.constant 0 : index
    %c0_66 = arith.constant 0 : index
    %164 = vector.load %arg13[%c0_65, %c0_66] : memref<256x128xbf16, #tpu.memory_space<vmem>>, vector<256x128xbf16>
    %cst_67 = arith.constant dense<0.000000e+00> : vector<8x128xf32>
    %165 = tpu.matmul %163, %164, %cst_67 {dimension_numbers = #tpu.dot_dimension_numbers<[1], [0], [0], [1], [0, 0, 1, 1], [], []>} : vector<8x256xbf16>, vector<256x128xbf16>, vector<8x128xf32> -> vector<8x128xf32>
    %c0_68 = arith.constant 0 : index
    %c0_69 = arith.constant 0 : index
    %166 = vector.load %arg14[%c0_68, %c0_69] : memref<1x128xf32, #tpu.memory_space<vmem>>, vector<1x128xf32>
    %167 = vector.broadcast %166 : vector<1x128xf32> to vector<8x128xf32>
    %168 = arith.addf %165, %167 : vector<8x128xf32>
    %169 = arith.addf %130, %168 : vector<8x128xf32>
    %c0_70 = arith.constant 0 : index
    %c0_71 = arith.constant 0 : index
    %c0_72 = arith.constant 0 : index
    %170 = vector.load %arg15[%c0_70, %c0_71, %c0_72] : memref<1x8x128xf32, #tpu.memory_space<vmem>>, vector<1x8x128xf32>
    %171 = vector.shape_cast %170 : vector<1x8x128xf32> to vector<8x128xf32>
    %172 = vector.shape_cast %169 : vector<8x128xf32> to vector<1x8x128xf32>
    tpu.vector_store %arg15[%c0_70, %c0_71, %c0_72], %172 {strides = array<i32>} : memref<1x8x128xf32, #tpu.memory_space<vmem>>, vector<1x8x128xf32>,
    return
  }
  func.func @transform_0(%arg0: i32) -> (i32, i32, i32) {
    %c0_i32 = arith.constant 0 : i32
    %c0_i32_0 = arith.constant 0 : i32
    %c0_i32_1 = arith.constant 0 : i32
    return %arg0, %c0_i32, %c0_i32_0 : i32, i32, i32
  }
  func.func @transform_1(%arg0: i32) -> (i32, i32, i32) {
    %c0_i32 = arith.constant 0 : i32
    %c0_i32_0 = arith.constant 0 : i32
    %c0_i32_1 = arith.constant 0 : i32
    return %arg0, %c0_i32, %c0_i32_0 : i32, i32, i32
  }
  func.func @transform_2(%arg0: i32) -> (i32, i32) {
    %c0_i32 = arith.constant 0 : i32
    %c0_i32_0 = arith.constant 0 : i32
    %c0_i32_1 = arith.constant 0 : i32
    return %c0_i32, %c0_i32_0 : i32, i32
  }
  func.func @transform_3(%arg0: i32) -> (i32, i32) {
    %c0_i32 = arith.constant 0 : i32
    %c0_i32_0 = arith.constant 0 : i32
    %c0_i32_1 = arith.constant 0 : i32
    return %c0_i32, %c0_i32_0 : i32, i32
  }
  func.func @transform_4(%arg0: i32) -> (i32, i32) {
    %c0_i32 = arith.constant 0 : i32
    %c0_i32_0 = arith.constant 0 : i32
    %c0_i32_1 = arith.constant 0 : i32
    return %c0_i32, %c0_i32_0 : i32, i32
  }
  func.func @transform_5(%arg0: i32) -> (i32, i32) {
    %c0_i32 = arith.constant 0 : i32
    %c0_i32_0 = arith.constant 0 : i32
    %c0_i32_1 = arith.constant 0 : i32
    return %c0_i32, %c0_i32_0 : i32, i32
  }
  func.func @transform_6(%arg0: i32) -> (i32, i32) {
    %c0_i32 = arith.constant 0 : i32
    %c0_i32_0 = arith.constant 0 : i32
    %c0_i32_1 = arith.constant 0 : i32
    return %c0_i32, %c0_i32_0 : i32, i32
  }
  func.func @transform_7(%arg0: i32) -> (i32, i32) {
    %c0_i32 = arith.constant 0 : i32
    %c0_i32_0 = arith.constant 0 : i32
    %c0_i32_1 = arith.constant 0 : i32
    return %c0_i32, %c0_i32_0 : i32, i32
  }
  func.func @transform_8(%arg0: i32) -> (i32, i32) {
    %c0_i32 = arith.constant 0 : i32
    %c0_i32_0 = arith.constant 0 : i32
    %c0_i32_1 = arith.constant 0 : i32
    return %c0_i32, %c0_i32_0 : i32, i32
  }
  func.func @transform_9(%arg0: i32) -> (i32, i32) {
    %c0_i32 = arith.constant 0 : i32
    %c0_i32_0 = arith.constant 0 : i32
    %c0_i32_1 = arith.constant 0 : i32
    return %c0_i32, %c0_i32_0 : i32, i32
  }
  func.func @transform_10(%arg0: i32) -> (i32, i32) {
    %c0_i32 = arith.constant 0 : i32
    %c0_i32_0 = arith.constant 0 : i32
    %c0_i32_1 = arith.constant 0 : i32
    return %c0_i32, %c0_i32_0 : i32, i32
  }
  func.func @transform_11(%arg0: i32) -> (i32, i32) {
    %c0_i32 = arith.constant 0 : i32
    %c0_i32_0 = arith.constant 0 : i32
    %c0_i32_1 = arith.constant 0 : i32
    return %c0_i32, %c0_i32_0 : i32, i32
  }
  func.func @transform_12(%arg0: i32) -> (i32, i32) {
    %c0_i32 = arith.constant 0 : i32
    %c0_i32_0 = arith.constant 0 : i32
    %c0_i32_1 = arith.constant 0 : i32
    return %c0_i32, %c0_i32_0 : i32, i32
  }
  func.func @transform_13(%arg0: i32) -> (i32, i32) {
    %c0_i32 = arith.constant 0 : i32
    %c0_i32_0 = arith.constant 0 : i32
    %c0_i32_1 = arith.constant 0 : i32
    return %c0_i32, %c0_i32_0 : i32, i32
  }
  func.func @transform_14(%arg0: i32) -> (i32, i32, i32) {
    %c0_i32 = arith.constant 0 : i32
    %c0_i32_0 = arith.constant 0 : i32
    %c0_i32_1 = arith.constant 0 : i32
    return %arg0, %c0_i32, %c0_i32_0 : i32, i32, i32
  }
}

</mosaic_0001>

<llo_original>
// kernel: tpu_custom_call.1
$region0: #{tpu_custom_call.1}
  #allocation0 [shape = 'u32[]', space=smem, size = 0x4, offset = 0x4, fixed_abs, tag = 'smem constant byte address 0x4 - core index']
  #allocation1 [shape = 'u32[144,128]{1,0:T(1,128)}', space=vmem, size = 0x12000, scoped, tag = 'internal scratch']
  #allocation2 [shape = 'f32[8,128]{1,0:T(8,128)}', space=vmem, size = 0x1000, scoped, tag = 'scratch operand']
  %s0 = inlined_call_operand.hbm [shape: f32[2,8,128], index: 0, kind: input, shape index: {}]
  %s1 = inlined_call_operand.vmem [shape: f32[2,1,8], index: 1, kind: input, shape index: {}]
  %s2 = inlined_call_operand.hbm [shape: f32[1,128], index: 2, kind: input, shape index: {}]
  %s3 = inlined_call_operand.vmem [shape: f32[1,128], index: 3, kind: input, shape index: {}]
  %s4 = inlined_call_operand.hbm [shape: bf16[128,384], index: 4, kind: input, shape index: {}]
  %s5 = inlined_call_operand.vmem [shape: f32[1,384], index: 5, kind: input, shape index: {}]
  %s6 = inlined_call_operand.hbm [shape: bf16[128,128], index: 6, kind: input, shape index: {}]
  %s7 = inlined_call_operand.vmem [shape: f32[1,128], index: 7, kind: input, shape index: {}]
  %s8 = inlined_call_operand.vmem [shape: f32[1,128], index: 8, kind: input, shape index: {}]
  %s9 = inlined_call_operand.vmem [shape: f32[1,128], index: 9, kind: input, shape index: {}]
  %s10 = inlined_call_operand.hbm [shape: bf16[128,256], index: 10, kind: input, shape index: {}]
  %s11 = inlined_call_operand.vmem [shape: f32[1,256], index: 11, kind: input, shape index: {}]
  %s12 = inlined_call_operand.hbm [shape: bf16[256,128], index: 12, kind: input, shape index: {}]
  %s13 = inlined_call_operand.vmem [shape: f32[1,128], index: 13, kind: input, shape index: {}]
  %s14 = inlined_call_operand.hbm [shape: f32[2,8,128], index: 14, kind: output, shape index: {}]
  %s15 = sld [smem:[#allocation0]]
  $region113: #{tpu_custom_call.1} parent=0
    _
  %s17 = ssub.s32 1, %s15
  %s18 = scalar_select 0, %s17, %s15
  $region1: #{tpu_custom_call.1} parent=0
    #allocation3 [shape = 'u8[8192]{0}', space=vmem, size = 0x2000, scoped, tag = 'input window, operand 0']
    #allocation4 [shape = 's32[2]{0}', space=sflag, size = 0x8, scoped, tag = 'scoped memory for tpu_custom_call.1']
    #allocation5 [shape = 's32[2]{0}', space=sflag, size = 0x8, scoped, tag = 'scoped memory for tpu_custom_call.1']
    #allocation6 [shape = 'u8[512]{0}', space=vmem, size = 0x400, scoped, tag = 'input window, operand 2, single buffered']
    #allocation7 [shape = 's32[1]{0}', space=sflag, size = 0x4, scoped, tag = 'scoped memory for tpu_custom_call.1']
    #allocation8 [shape = 'u8[98304]{0}', space=vmem, size = 0x18000, scoped, tag = 'input window, operand 4, single buffered']
    #allocation9 [shape = 'u8[32768]{0}', space=vmem, size = 0x8000, scoped, tag = 'input window, operand 6, single buffered']
    #allocation10 [shape = 's32[1]{0}', space=sflag, size = 0x4, scoped, tag = 'scoped memory for tpu_custom_call.1']
    #allocation11 [shape = 'u8[65536]{0}', space=vmem, size = 0x10000, scoped, tag = 'input window, operand 10, single buffered']
    #allocation12 [shape = 'u8[65536]{0}', space=vmem, size = 0x10000, scoped, tag = 'input window, operand 12, single buffered']
    #allocation13 [shape = 's32[1]{0}', space=sflag, size = 0x4, scoped, tag = 'scoped memory for tpu_custom_call.1']
    #allocation14 [shape = 'u8[8192]{0}', space=vmem, size = 0x2000, scoped, tag = 'output window, operand 0']
    %19 = vsyncpa [#allocation4], 0
    %s20 = scalar_lea.sflag [#allocation4], 1
    %21 = vsyncpa %s20, 0
    %22 = vsyncpa [#allocation7], 0
    %23 = vsyncpa [#allocation10], 0
    %24 = vsyncpa [#allocation13], 0
    %25 = vsyncpa [#allocation5], 0
    %s26 = scalar_lea.sflag [#allocation5], 1
    %27 = vsyncpa %s26, 0
    loop: start=0, step=1, limit=4
    $region2: #{tpu_custom_call.1} parent=1 // loop_pre_header
      _
    $region3: #{tpu_custom_call.1} parent=1 // loop_header
      %s29 = sphi 0, %s33
      %p30 = scmp.ge.s32.totalorder %s29, 4
      %s39 = sphi 0, %s41
      %s42 = sphi 0, %s39
      %s43 = sphi 0, %s42
      %s59 = sphi 0, %s43
      %s65 = sphi 0, %s67
      %s68 = sphi 0, %s65
      %s69 = sphi 0, %s68
      %s85 = sphi 0, %s69
      %s89 = sphi 0, %s89
      %s91 = sphi 0, %s89
      %s92 = sphi 0, %s91
      %s106 = sphi 0, %s92
      %s110 = sphi 0, %s110
      %s112 = sphi 0, %s110
      %s113 = sphi 0, %s112
      %s127 = sphi 0, %s113
      %s131 = sphi 0, %s131
      %s133 = sphi 0, %s131
      %s134 = sphi 0, %s133
      %s148 = sphi 0, %s134
      %s152 = sphi 0, %s152
      %s154 = sphi 0, %s152
      %s155 = sphi 0, %s154
      %s169 = sphi 0, %s155
      %s173 = sphi 0, %s173
      %s175 = sphi 0, %s173
      %s176 = sphi 0, %s175
      %s190 = sphi 0, %s176
      %s194 = sphi 0, %s194
      %s196 = sphi 0, %s194
      %s197 = sphi 0, %s196
      %s211 = sphi 0, %s197
      %s215 = sphi 0, %s215
      %s217 = sphi 0, %s215
      %s218 = sphi 0, %s217
      %s232 = sphi 0, %s218
      %s236 = sphi 0, %s236
      %s238 = sphi 0, %s236
      %s239 = sphi 0, %s238
      %s253 = sphi 0, %s239
      %s257 = sphi 0, %s257
      %s259 = sphi 0, %s257
      %s260 = sphi 0, %s259
      %s274 = sphi 0, %s260
      %s278 = sphi 0, %s278
      %s280 = sphi 0, %s278
      %s281 = sphi 0, %s280
      %s295 = sphi 0, %s281
      %s299 = sphi 0, %s299
      %s301 = sphi 0, %s299
      %s302 = sphi 0, %s301
      %s316 = sphi 0, %s302
      %s320 = sphi 0, %s320
      %s322 = sphi 0, %s320
      %s323 = sphi 0, %s322
      %s337 = sphi 0, %s323
      %s343 = sphi 0, %s345
      %s346 = sphi 0, %s343
      %s347 = sphi 0, %s346
      %s363 = sphi 0, %s347
    $region4: #{tpu_custom_call.1} parent=1 // loop_header_branch
      %32 = sbr.rel (%p30) target = $region8
    $region5: #{tpu_custom_call.1} parent=1 // loop_body
      %s34 = ssub.s32 %s29, 1
      %s35 = ssub.s32 %s29, 2
      %s36 = sadd.s32 %s29, 1
      %s37 = ssub.s32 %s29, %s36
      %p38 = scmp.eq.s32.totalorder %s37, 0
      %s40 = sadd.s32 %s39, 1
      %s41 = scalar_select %p38, %s39, %s40
      %p44 = pneg %p38
      %p45 = scmp.eq.s32.totalorder %s29, 1
      %p46 = por %p44, %p45
      %p47 = scmp.ne.s32.totalorder %s39, %s42
      %p48 = scmp.eq.s32.totalorder %s29, 0
      %p49 = por %p47, %p48
      %p50 = scmp.ne.s32.totalorder %s39, %s42
      %p51 = scmp.eq.s32.totalorder %s34, 1
      %p52 = por %p50, %p51
      %p53 = scmp.ne.s32.totalorder %s42, %s43
      %p54 = scmp.eq.s32.totalorder %s34, 0
      %p55 = por %p53, %p54
      %p56 = scmp.ne.s32.totalorder %s42, %s43
      %p57 = scmp.eq.s32.totalorder %s35, 1
      %p58 = por %p56, %p57
      %p60 = scmp.ne.s32.totalorder %s43, %s59
      %p61 = scmp.eq.s32.totalorder %s35, 0
      %p62 = por %p60, %p61
      %s63 = ssub.s32 %s29, %s36
      %p64 = scmp.eq.s32.totalorder %s63, 0
      %s66 = sadd.s32 %s65, 1
      %s67 = scalar_select %p64, %s65, %s66
      %p70 = pneg %p64
      %p71 = scmp.eq.s32.totalorder %s29, 1
      %p72 = por %p70, %p71
      %p73 = scmp.ne.s32.totalorder %s65, %s68
      %p74 = scmp.eq.s32.totalorder %s29, 0
      %p75 = por %p73, %p74
      %p76 = scmp.ne.s32.totalorder %s65, %s68
      %p77 = scmp.eq.s32.totalorder %s34, 1
      %p78 = por %p76, %p77
      %p79 = scmp.ne.s32.totalorder %s68, %s69
      %p80 = scmp.eq.s32.totalorder %s34, 0
      %p81 = por %p79, %p80
      %p82 = scmp.ne.s32.totalorder %s68, %s69
      %p83 = scmp.eq.s32.totalorder %s35, 1
      %p84 = por %p82, %p83
      %p86 = scmp.ne.s32.totalorder %s69, %s85
      %p87 = scmp.eq.s32.totalorder %s35, 0
      %p88 = por %p86, %p87
      %s90 = sadd.s32 %s89, 1
      %p93 = scmp.eq.s32.totalorder %s29, 1
      %p94 = scmp.ne.s32.totalorder %s89, %s91
      %p95 = scmp.eq.s32.totalorder %s29, 0
      %p96 = por %p94, %p95
      %p97 = scmp.ne.s32.totalorder %s89, %s91
      %p98 = scmp.eq.s32.totalorder %s34, 1
      %p99 = por %p97, %p98
      %p100 = scmp.ne.s32.totalorder %s91, %s92
      %p101 = scmp.eq.s32.totalorder %s34, 0
      %p102 = por %p100, %p101
      %p103 = scmp.ne.s32.totalorder %s91, %s92
      %p104 = scmp.eq.s32.totalorder %s35, 1
      %p105 = por %p103, %p104
      %p107 = scmp.ne.s32.totalorder %s92, %s106
      %p108 = scmp.eq.s32.totalorder %s35, 0
      %p109 = por %p107, %p108
      %s111 = sadd.s32 %s110, 1
      %p114 = scmp.eq.s32.totalorder %s29, 1
      %p115 = scmp.ne.s32.totalorder %s110, %s112
      %p116 = scmp.eq.s32.totalorder %s29, 0
      %p117 = por %p115, %p116
      %p118 = scmp.ne.s32.totalorder %s110, %s112
      %p119 = scmp.eq.s32.totalorder %s34, 1
      %p120 = por %p118, %p119
      %p121 = scmp.ne.s32.totalorder %s112, %s113
      %p122 = scmp.eq.s32.totalorder %s34, 0
      %p123 = por %p121, %p122
      %p124 = scmp.ne.s32.totalorder %s112, %s113
      %p125 = scmp.eq.s32.totalorder %s35, 1
      %p126 = por %p124, %p125
      %p128 = scmp.ne.s32.totalorder %s113, %s127
      %p129 = scmp.eq.s32.totalorder %s35, 0
      %p130 = por %p128, %p129
      %s132 = sadd.s32 %s131, 1
      %p135 = scmp.eq.s32.totalorder %s29, 1
      %p136 = scmp.ne.s32.totalorder %s131, %s133
      %p137 = scmp.eq.s32.totalorder %s29, 0
      %p138 = por %p136, %p137
      %p139 = scmp.ne.s32.totalorder %s131, %s133
      %p140 = scmp.eq.s32.totalorder %s34, 1
      %p141 = por %p139, %p140
      %p142 = scmp.ne.s32.totalorder %s133, %s134
      %p143 = scmp.eq.s32.totalorder %s34, 0
      %p144 = por %p142, %p143
      %p145 = scmp.ne.s32.totalorder %s133, %s134
      %p146 = scmp.eq.s32.totalorder %s35, 1
      %p147 = por %p145, %p146
      %p149 = scmp.ne.s32.totalorder %s134, %s148
      %p150 = scmp.eq.s32.totalorder %s35, 0
      %p151 = por %p149, %p150
      %s153 = sadd.s32 %s152, 1
      %p156 = scmp.eq.s32.totalorder %s29, 1
      %p157 = scmp.ne.s32.totalorder %s152, %s154
      %p158 = scmp.eq.s32.totalorder %s29, 0
      %p159 = por %p157, %p158
      %p160 = scmp.ne.s32.totalorder %s152, %s154
      %p161 = scmp.eq.s32.totalorder %s34, 1
      %p162 = por %p160, %p161
      %p163 = scmp.ne.s32.totalorder %s154, %s155
      %p164 = scmp.eq.s32.totalorder %s34, 0
      %p165 = por %p163, %p164
      %p166 = scmp.ne.s32.totalorder %s154, %s155
      %p167 = scmp.eq.s32.totalorder %s35, 1
      %p168 = por %p166, %p167
      %p170 = scmp.ne.s32.totalorder %s155, %s169
      %p171 = scmp.eq.s32.totalorder %s35, 0
      %p172 = por %p170, %p171
      %s174 = sadd.s32 %s173, 1
      %p177 = scmp.eq.s32.totalorder %s29, 1
      %p178 = scmp.ne.s32.totalorder %s173, %s175
      %p179 = scmp.eq.s32.totalorder %s29, 0
      %p180 = por %p178, %p179
      %p181 = scmp.ne.s32.totalorder %s173, %s175
      %p182 = scmp.eq.s32.totalorder %s34, 1
      %p183 = por %p181, %p182
      %p184 = scmp.ne.s32.totalorder %s175, %s176
      %p185 = scmp.eq.s32.totalorder %s34, 0
      %p186 = por %p184, %p185
      %p187 = scmp.ne.s32.totalorder %s175, %s176
      %p188 = scmp.eq.s32.totalorder %s35, 1
      %p189 = por %p187, %p188
      %p191 = scmp.ne.s32.totalorder %s176, %s190
      %p192 = scmp.eq.s32.totalorder %s35, 0
      %p193 = por %p191, %p192
      %s195 = sadd.s32 %s194, 1
      %p198 = scmp.eq.s32.totalorder %s29, 1
      %p199 = scmp.ne.s32.totalorder %s194, %s196
      %p200 = scmp.eq.s32.totalorder %s29, 0
      %p201 = por %p199, %p200
      %p202 = scmp.ne.s32.totalorder %s194, %s196
      %p203 = scmp.eq.s32.totalorder %s34, 1
      %p204 = por %p202, %p203
      %p205 = scmp.ne.s32.totalorder %s196, %s197
      %p206 = scmp.eq.s32.totalorder %s34, 0
      %p207 = por %p205, %p206
      %p208 = scmp.ne.s32.totalorder %s196, %s197
      %p209 = scmp.eq.s32.totalorder %s35, 1
      %p210 = por %p208, %p209
      %p212 = scmp.ne.s32.totalorder %s197, %s211
      %p213 = scmp.eq.s32.totalorder %s35, 0
      %p214 = por %p212, %p213
      %s216 = sadd.s32 %s215, 1
      %p219 = scmp.eq.s32.totalorder %s29, 1
      %p220 = scmp.ne.s32.totalorder %s215, %s217
      %p221 = scmp.eq.s32.totalorder %s29, 0
      %p222 = por %p220, %p221
      %p223 = scmp.ne.s32.totalorder %s215, %s217
      %p224 = scmp.eq.s32.totalorder %s34, 1
      %p225 = por %p223, %p224
      %p226 = scmp.ne.s32.totalorder %s217, %s218
      %p227 = scmp.eq.s32.totalorder %s34, 0
      %p228 = por %p226, %p227
      %p229 = scmp.ne.s32.totalorder %s217, %s218
      %p230 = scmp.eq.s32.totalorder %s35, 1
      %p231 = por %p229, %p230
      %p233 = scmp.ne.s32.totalorder %s218, %s232
      %p234 = scmp.eq.s32.totalorder %s35, 0
      %p235 = por %p233, %p234
      %s237 = sadd.s32 %s236, 1
      %p240 = scmp.eq.s32.totalorder %s29, 1
      %p241 = scmp.ne.s32.totalorder %s236, %s238
      %p242 = scmp.eq.s32.totalorder %s29, 0
      %p243 = por %p241, %p242
      %p244 = scmp.ne.s32.totalorder %s236, %s238
      %p245 = scmp.eq.s32.totalorder %s34, 1
      %p246 = por %p244, %p245
      %p247 = scmp.ne.s32.totalorder %s238, %s239
      %p248 = scmp.eq.s32.totalorder %s34, 0
      %p249 = por %p247, %p248
      %p250 = scmp.ne.s32.totalorder %s238, %s239
      %p251 = scmp.eq.s32.totalorder %s35, 1
      %p252 = por %p250, %p251
      %p254 = scmp.ne.s32.totalorder %s239, %s253
      %p255 = scmp.eq.s32.totalorder %s35, 0
      %p256 = por %p254, %p255
      %s258 = sadd.s32 %s257, 1
      %p261 = scmp.eq.s32.totalorder %s29, 1
      %p262 = scmp.ne.s32.totalorder %s257, %s259
      %p263 = scmp.eq.s32.totalorder %s29, 0
      %p264 = por %p262, %p263
      %p265 = scmp.ne.s32.totalorder %s257, %s259
      %p266 = scmp.eq.s32.totalorder %s34, 1
      %p267 = por %p265, %p266
      %p268 = scmp.ne.s32.totalorder %s259, %s260
      %p269 = scmp.eq.s32.totalorder %s34, 0
      %p270 = por %p268, %p269
      %p271 = scmp.ne.s32.totalorder %s259, %s260
      %p272 = scmp.eq.s32.totalorder %s35, 1
      %p273 = por %p271, %p272
      %p275 = scmp.ne.s32.totalorder %s260, %s274
      %p276 = scmp.eq.s32.totalorder %s35, 0
      %p277 = por %p275, %p276
      %s279 = sadd.s32 %s278, 1
      %p282 = scmp.eq.s32.totalorder %s29, 1
      %p283 = scmp.ne.s32.totalorder %s278, %s280
      %p284 = scmp.eq.s32.totalorder %s29, 0
      %p285 = por %p283, %p284
      %p286 = scmp.ne.s32.totalorder %s278, %s280
      %p287 = scmp.eq.s32.totalorder %s34, 1
      %p288 = por %p286, %p287
      %p289 = scmp.ne.s32.totalorder %s280, %s281
      %p290 = scmp.eq.s32.totalorder %s34, 0
      %p291 = por %p289, %p290
      %p292 = scmp.ne.s32.totalorder %s280, %s281
      %p293 = scmp.eq.s32.totalorder %s35, 1
      %p294 = por %p292, %p293
      %p296 = scmp.ne.s32.totalorder %s281, %s295
      %p297 = scmp.eq.s32.totalorder %s35, 0
      %p298 = por %p296, %p297
      %s300 = sadd.s32 %s299, 1
      %p303 = scmp.eq.s32.totalorder %s29, 1
      %p304 = scmp.ne.s32.totalorder %s299, %s301
      %p305 = scmp.eq.s32.totalorder %s29, 0
      %p306 = por %p304, %p305
      %p307 = scmp.ne.s32.totalorder %s299, %s301
      %p308 = scmp.eq.s32.totalorder %s34, 1
      %p309 = por %p307, %p308
      %p310 = scmp.ne.s32.totalorder %s301, %s302
      %p311 = scmp.eq.s32.totalorder %s34, 0
      %p312 = por %p310, %p311
      %p313 = scmp.ne.s32.totalorder %s301, %s302
      %p314 = scmp.eq.s32.totalorder %s35, 1
      %p315 = por %p313, %p314
      %p317 = scmp.ne.s32.totalorder %s302, %s316
      %p318 = scmp.eq.s32.totalorder %s35, 0
      %p319 = por %p317, %p318
      %s321 = sadd.s32 %s320, 1
      %p324 = scmp.eq.s32.totalorder %s29, 1
      %p325 = scmp.ne.s32.totalorder %s320, %s322
      %p326 = scmp.eq.s32.totalorder %s29, 0
      %p327 = por %p325, %p326
      %p328 = scmp.ne.s32.totalorder %s320, %s322
      %p329 = scmp.eq.s32.totalorder %s34, 1
      %p330 = por %p328, %p329
      %p331 = scmp.ne.s32.totalorder %s322, %s323
      %p332 = scmp.eq.s32.totalorder %s34, 0
      %p333 = por %p331, %p332
      %p334 = scmp.ne.s32.totalorder %s322, %s323
      %p335 = scmp.eq.s32.totalorder %s35, 1
      %p336 = por %p334, %p335
      %p338 = scmp.ne.s32.totalorder %s323, %s337
      %p339 = scmp.eq.s32.totalorder %s35, 0
      %p340 = por %p338, %p339
      %s341 = ssub.s32 %s29, %s36
      %p342 = scmp.eq.s32.totalorder %s341, 0
      %s344 = sadd.s32 %s343, 1
      %s345 = scalar_select %p342, %s343, %s344
      %p348 = pneg %p342
      %p349 = scmp.eq.s32.totalorder %s29, 1
      %p350 = por %p348, %p349
      %p351 = scmp.ne.s32.totalorder %s343, %s346
      %p352 = scmp.eq.s32.totalorder %s29, 0
      %p353 = por %p351, %p352
      %p354 = scmp.ne.s32.totalorder %s343, %s346
      %p355 = scmp.eq.s32.totalorder %s34, 1
      %p356 = por %p354, %p355
      %p357 = scmp.ne.s32.totalorder %s346, %s347
      %p358 = scmp.eq.s32.totalorder %s34, 0
      %p359 = por %p357, %p358
      %p360 = scmp.ne.s32.totalorder %s346, %s347
      %p361 = scmp.eq.s32.totalorder %s35, 1
      %p362 = por %p360, %p361
      %p364 = scmp.ne.s32.totalorder %s347, %s363
      %p365 = scmp.eq.s32.totalorder %s35, 0
      %p366 = por %p364, %p365
      %p367 = scmp.le.s32.totalorder 1, %s29
      %p368 = scmp.lt.s32.totalorder %s29, 3
      %p369 = pnand %p367, %p368
      %p370 = pneg %p369
      // Predicated region
      $region9: #{tpu_custom_call.1} parent=5 // pred_check
        _
      $region10: #{tpu_custom_call.1} parent=5 // pred_check_branch
        %372 = sbr.rel (%p369) target = $region12
      $region11: #{tpu_custom_call.1} parent=5 // pred_region
        %s373 = ssub.s32 %s29, 1
        // Predicated region
        $region13: #{tpu_custom_call.1} parent=11 // pred_check
          %p374 = pneg %p102
        $region14: #{tpu_custom_call.1} parent=11 // pred_check_branch
          %376 = sbr.rel (%p374) target = $region16
        $region15: #{tpu_custom_call.1} parent=11 // pred_region
          %s378 = ssub.s32 16, 16
          %379 = vsyncadd [#allocation7], %s378
          %s381 = sshll.u32 [#allocation6], 4
          %s382 = int_to_ptr.vmem [resolvable:$true] %s381
          %384 = dma.hbm_to_vmem [thread:$0]  %s2, 16, %s382, [#allocation7]
        $region16: #{tpu_custom_call.1} parent=11 // pred_fallthru
          _
        // Predicated region
        $region17: #{tpu_custom_call.1} parent=11 // pred_check
          %p385 = pneg %p123
        $region18: #{tpu_custom_call.1} parent=11 // pred_check_branch
          %387 = sbr.rel (%p385) target = $region20
        $region19: #{tpu_custom_call.1} parent=11 // pred_region
          _
        $region20: #{tpu_custom_call.1} parent=11 // pred_fallthru
          _
        // Predicated region
        $region21: #{tpu_custom_call.1} parent=11 // pred_check
          %p388 = pneg %p144
        $region22: #{tpu_custom_call.1} parent=11 // pred_check_branch
          %390 = sbr.rel (%p388) target = $region24
        $region23: #{tpu_custom_call.1} parent=11 // pred_region
          %s392 = ssub.s32 3072, 3072
          %393 = vsyncadd [#allocation7], %s392
          %s394 = sshll.u32 [#allocation8], 4
          %s395 = int_to_ptr.vmem [resolvable:$true] %s394
          %400 = dma.hbm_to_vmem [thread:$0]  %s4, 3072, %s395, [#allocation7], 192, 192, 12
        $region24: #{tpu_custom_call.1} parent=11 // pred_fallthru
          _
        // Predicated region
        $region25: #{tpu_custom_call.1} parent=11 // pred_check
          %p401 = pneg %p165
        $region26: #{tpu_custom_call.1} parent=11 // pred_check_branch
          %403 = sbr.rel (%p401) target = $region28
        $region27: #{tpu_custom_call.1} parent=11 // pred_region
          _
        $region28: #{tpu_custom_call.1} parent=11 // pred_fallthru
          _
        // Predicated region
        $region29: #{tpu_custom_call.1} parent=11 // pred_check
          %p404 = pneg %p186
        $region30: #{tpu_custom_call.1} parent=11 // pred_check_branch
          %406 = sbr.rel (%p404) target = $region32
        $region31: #{tpu_custom_call.1} parent=11 // pred_region
          %s408 = ssub.s32 1024, 1024
          %409 = vsyncadd [#allocation10], %s408
          %s410 = sshll.u32 [#allocation9], 4
          %s411 = int_to_ptr.vmem [resolvable:$true] %s410
          %416 = dma.hbm_to_vmem [thread:$0]  %s6, 1024, %s411, [#allocation10], 64, 64, 4
        $region32: #{tpu_custom_call.1} parent=11 // pred_fallthru
          _
        // Predicated region
        $region33: #{tpu_custom_call.1} parent=11 // pred_check
          %p417 = pneg %p207
        $region34: #{tpu_custom_call.1} parent=11 // pred_check_branch
          %419 = sbr.rel (%p417) target = $region36
        $region35: #{tpu_custom_call.1} parent=11 // pred_region
          _
        $region36: #{tpu_custom_call.1} parent=11 // pred_fallthru
          _
        // Predicated region
        $region37: #{tpu_custom_call.1} parent=11 // pred_check
          %p420 = pneg %p228
        $region38: #{tpu_custom_call.1} parent=11 // pred_check_branch
          %422 = sbr.rel (%p420) target = $region40
        $region39: #{tpu_custom_call.1} parent=11 // pred_region
          _
        $region40: #{tpu_custom_call.1} parent=11 // pred_fallthru
          _
        // Predicated region
        $region41: #{tpu_custom_call.1} parent=11 // pred_check
          %p423 = pneg %p249
        $region42: #{tpu_custom_call.1} parent=11 // pred_check_branch
          %425 = sbr.rel (%p423) target = $region44
        $region43: #{tpu_custom_call.1} parent=11 // pred_region
          _
        $region44: #{tpu_custom_call.1} parent=11 // pred_fallthru
          _
        // Predicated region
        $region45: #{tpu_custom_call.1} parent=11 // pred_check
          %p426 = pneg %p270
        $region46: #{tpu_custom_call.1} parent=11 // pred_check_branch
          %428 = sbr.rel (%p426) target = $region48
        $region47: #{tpu_custom_call.1} parent=11 // pred_region
          %s430 = ssub.s32 2048, 2048
          %431 = vsyncadd [#allocation10], %s430
          %s432 = sshll.u32 [#allocation11], 4
          %s433 = int_to_ptr.vmem [resolvable:$true] %s432
          %438 = dma.hbm_to_vmem [thread:$0]  %s10, 2048, %s433, [#allocation10], 128, 128, 8
        $region48: #{tpu_custom_call.1} parent=11 // pred_fallthru
          _
        // Predicated region
        $region49: #{tpu_custom_call.1} parent=11 // pred_check
          %p439 = pneg %p291
        $region50: #{tpu_custom_call.1} parent=11 // pred_check_branch
          %441 = sbr.rel (%p439) target = $region52
        $region51: #{tpu_custom_call.1} parent=11 // pred_region
          _
        $region52: #{tpu_custom_call.1} parent=11 // pred_fallthru
          _
        // Predicated region
        $region53: #{tpu_custom_call.1} parent=11 // pred_check
          %p442 = pneg %p312
        $region54: #{tpu_custom_call.1} parent=11 // pred_check_branch
          %444 = sbr.rel (%p442) target = $region56
        $region55: #{tpu_custom_call.1} parent=11 // pred_region
          %s446 = ssub.s32 2048, 2048
          %447 = vsyncadd [#allocation13], %s446
          %s448 = sshll.u32 [#allocation12], 4
          %s449 = int_to_ptr.vmem [resolvable:$true] %s448
          %454 = dma.hbm_to_vmem [thread:$0]  %s12, 2048, %s449, [#allocation13], 64, 64, 4
        $region56: #{tpu_custom_call.1} parent=11 // pred_fallthru
          _
        // Predicated region
        $region57: #{tpu_custom_call.1} parent=11 // pred_check
          %p455 = pneg %p333
        $region58: #{tpu_custom_call.1} parent=11 // pred_check_branch
          %457 = sbr.rel (%p455) target = $region60
        $region59: #{tpu_custom_call.1} parent=11 // pred_region
          _
        $region60: #{tpu_custom_call.1} parent=11 // pred_fallthru
          _
      $region12: #{tpu_custom_call.1} parent=5 // pred_fallthru
        _
      %p458 = scmp.lt.s32.totalorder %s29, 2
      // Predicated region
      $region61: #{tpu_custom_call.1} parent=5 // pred_check
        %p459 = pneg %p458
      $region62: #{tpu_custom_call.1} parent=5 // pred_check_branch
        %461 = sbr.rel (%p459) target = $region64
      $region63: #{tpu_custom_call.1} parent=5 // pred_region
        // Predicated region
        $region65: #{tpu_custom_call.1} parent=63 // pred_check
          %p462 = pneg %p49
        $region66: #{tpu_custom_call.1} parent=63 // pred_check_branch
          %464 = sbr.rel (%p462) target = $region68
        $region67: #{tpu_custom_call.1} parent=63 // pred_region
          %s465 = sand.u32 %s39, 1
          %s466 = scalar_lea.sflag [#allocation4], %s465
          %s467 = sand.u32 %s39, 1
          %s468 = smul.addr %s467, 8
          %s469 = scalar_lea.vmem [#allocation3], %s468
          %s471 = ssub.s32 128, 128
          %472 = vsyncadd %s466, %s471
          %s473 = smul.addr %s29, 128
          %s474 = scalar_lea.hbm %s0, %s473
          %s476 = sshll.u32 %s469, 4
          %s477 = int_to_ptr.vmem [resolvable:$true] %s476
          %479 = dma.hbm_to_vmem [thread:$0]  %s474, 128, %s477, %s466
        $region68: #{tpu_custom_call.1} parent=63 // pred_fallthru
          _
        // Predicated region
        $region69: #{tpu_custom_call.1} parent=63 // pred_check
          %p480 = pneg %p75
        $region70: #{tpu_custom_call.1} parent=63 // pred_check_branch
          %482 = sbr.rel (%p480) target = $region72
        $region71: #{tpu_custom_call.1} parent=63 // pred_region
          %p483 = scmp.lt.s32.totalorder %s29, 1
          %s484 = scalar_select %p483, %s29, 1
          %s485 = scalar_lea.vmem %s1, %s484
        $region72: #{tpu_custom_call.1} parent=63 // pred_fallthru
          _
      $region64: #{tpu_custom_call.1} parent=5 // pred_fallthru
        _
      %p486 = scmp.le.s32.totalorder 1, %s29
      %p487 = scmp.lt.s32.totalorder %s29, 3
      %p488 = pnand %p486, %p487
      %p489 = pneg %p488
      // Predicated region
      $region73: #{tpu_custom_call.1} parent=5 // pred_check
        _
      $region74: #{tpu_custom_call.1} parent=5 // pred_check_branch
        %491 = sbr.rel (%p488) target = $region76
      $region75: #{tpu_custom_call.1} parent=5 // pred_region
        %s492 = ssub.s32 %s29, 1
        %s493 = sand.u32 %s42, 1
        %s494 = scalar_lea.sflag [#allocation4], %s493
        %s495 = sand.u32 %s42, 1
        %s496 = smul.addr %s495, 8
        %s497 = scalar_lea.vmem [#allocation3], %s496
        // Predicated region
        $region77: #{tpu_custom_call.1} parent=75 // pred_check
          %p498 = pneg %p55
        $region78: #{tpu_custom_call.1} parent=75 // pred_check_branch
          %500 = sbr.rel (%p498) target = $region80
        $region79: #{tpu_custom_call.1} parent=75 // pred_region
          %501 = dma.done %s494, 128
        $region80: #{tpu_custom_call.1} parent=75 // pred_fallthru
          _
        // Predicated region
        $region81: #{tpu_custom_call.1} parent=75 // pred_check
          %p502 = pneg %p102
        $region82: #{tpu_custom_call.1} parent=75 // pred_check_branch
          %504 = sbr.rel (%p502) target = $region84
        $region83: #{tpu_custom_call.1} parent=75 // pred_region
          %505 = dma.done [#allocation7], 16
        $region84: #{tpu_custom_call.1} parent=75 // pred_fallthru
          _
        // Predicated region
        $region85: #{tpu_custom_call.1} parent=75 // pred_check
          %p506 = pneg %p144
        $region86: #{tpu_custom_call.1} parent=75 // pred_check_branch
          %508 = sbr.rel (%p506) target = $region88
        $region87: #{tpu_custom_call.1} parent=75 // pred_region
          %509 = dma.done [#allocation7], 3072
        $region88: #{tpu_custom_call.1} parent=75 // pred_fallthru
          _
        // Predicated region
        $region89: #{tpu_custom_call.1} parent=75 // pred_check
          %p510 = pneg %p186
        $region90: #{tpu_custom_call.1} parent=75 // pred_check_branch
          %512 = sbr.rel (%p510) target = $region92
        $region91: #{tpu_custom_call.1} parent=75 // pred_region
          %513 = dma.done [#allocation10], 1024
        $region92: #{tpu_custom_call.1} parent=75 // pred_fallthru
          _
        // Predicated region
        $region93: #{tpu_custom_call.1} parent=75 // pred_check
          %p514 = pneg %p270
        $region94: #{tpu_custom_call.1} parent=75 // pred_check_branch
          %516 = sbr.rel (%p514) target = $region96
        $region95: #{tpu_custom_call.1} parent=75 // pred_region
          %517 = dma.done [#allocation10], 2048
        $region96: #{tpu_custom_call.1} parent=75 // pred_fallthru
          _
        // Predicated region
        $region97: #{tpu_custom_call.1} parent=75 // pred_check
          %p518 = pneg %p312
        $region98: #{tpu_custom_call.1} parent=75 // pred_check_branch
          %520 = sbr.rel (%p518) target = $region100
        $region99: #{tpu_custom_call.1} parent=75 // pred_region
          %521 = dma.done [#allocation13], 2048
        $region100: #{tpu_custom_call.1} parent=75 // pred_fallthru
          _
        %s522 = sand.u32 %s42, 1
        %s523 = scalar_lea.sflag [#allocation4], %s522
        %s524 = sand.u32 %s42, 1
        %s525 = smul.addr %s524, 8
        %s526 = scalar_lea.vmem [#allocation3], %s525
        %p527 = pneg %p55
        %p528 = pneg %p52
        %p529 = scmp.lt.s32.totalorder %s34, 1
        %s530 = scalar_select %p529, %s34, 1
        %s531 = scalar_lea.vmem %s1, %s530
        %p532 = pneg %p81
        %p533 = pneg %p78
        %p534 = pneg %p102
        %p535 = pneg %p99
        %p536 = pneg %p123
        %p537 = pneg %p120
        %p538 = pneg %p144
        %p539 = pneg %p141
        %p540 = pneg %p165
        %p541 = pneg %p162
        %p542 = pneg %p186
        %p543 = pneg %p183
        %p544 = pneg %p207
        %p545 = pneg %p204
        %p546 = pneg %p228
        %p547 = pneg %p225
        %p548 = pneg %p249
        %p549 = pneg %p246
        %p550 = pneg %p270
        %p551 = pneg %p267
        %p552 = pneg %p291
        %p553 = pneg %p288
        %p554 = pneg %p312
        %p555 = pneg %p309
        %p556 = pneg %p333
        %p557 = pneg %p330
        %p558 = pneg %p359
        %p559 = pneg %p356
        %s560 = sand.u32 %s346, 1
        %s561 = scalar_lea.sflag [#allocation5], %s560
        %s562 = sand.u32 %s346, 1
        %s563 = smul.addr %s562, 8
        %s564 = scalar_lea.vmem [#allocation14], %s563
        %p565 = scmp.lt.s32.totalorder %s34, 1
        %s566 = scalar_select %p565, %s34, 1
        %s567 = scalar_lea.vmem %s1, %s566
        %v569 = vld [vmem:[%s497] sm:$0xff]
        %v570 = vld [vmem:[%s567] sm:$0x1]
        %vm571 = vcmp.gt.f32.partialorder %v570, 0.0
        %v572 = vsel %vm571, 0.0, -1e+09
        %573 = vadd.xlane.f32.xlu0 %v569
        %v574 = vpop.xlane.xlu0 %573
        %v575 = vrcp.pop 128.0
        %v576 = vmul.f32 %v574, %v575
        %v577 = vsub.f32 %v569, %v576
        %v578 = vmul.f32 %v577, %v577
        %579 = vadd.xlane.f32.xlu0 %v578
        %v580 = vpop.xlane.xlu0 %579
        %v581 = vmul.f32 %v580, %v575
        %v582 = vadd.f32 %v581, 1e-06
        %v583 = vrsqrt.pop %v582
        %v584 = vmul.f32 %v577, %v583
        %v585 = vld [vmem:[#allocation6] sm:$0x1]
        %v587 = vlaneseq
        %v588 = vshrl.u32 %v587, 7
        %v589 = vsub.s32 0, %v588
        %v590 = vrot.slane %v585, %v589
        %v592 = vmul.f32 %v584, %v590
        %v593 = vld [vmem:[%s3] sm:$0x1]
        %v595 = vlaneseq
        %v596 = vshrl.u32 %v595, 7
        %v597 = vsub.s32 0, %v596
        %v598 = vrot.slane %v593, %v597
        %v600 = vadd.f32 %v592, %v598
        %v601 = vpack.c.bf16 %v600, %v600
        %v602 = vld [vmem:[#allocation8] sm:$0xff]
        %v603 = vld [vmem:[#allocation8 + $0x8] sm:$0xf]
        %v604 = vld [vmem:[#allocation8 + $0xc] sm:$0xff]
        %v605 = vld [vmem:[#allocation8 + $0x14] sm:$0xf]
        %v606 = vld [vmem:[#allocation8 + $0x18] sm:$0xff]
        %v607 = vld [vmem:[#allocation8 + $0x20] sm:$0xf]
        %v608 = vld [vmem:[#allocation8 + $0x24] sm:$0xff]
        %v609 = vld [vmem:[#allocation8 + $0x2c] sm:$0xf]
        %v610 = vld [vmem:[#allocation8 + $0x30] sm:$0xff]
        %v611 = vld [vmem:[#allocation8 + $0x38] sm:$0xf]
        %v612 = vld [vmem:[#allocation8 + $0x3c] sm:$0xff]
        %v613 = vld [vmem:[#allocation8 + $0x44] sm:$0xf]
        %v614 = vld [vmem:[#allocation8 + $0x48] sm:$0xff]
        %v615 = vld [vmem:[#allocation8 + $0x50] sm:$0xf]
        %v616 = vld [vmem:[#allocation8 + $0x54] sm:$0xff]
        %v617 = vld [vmem:[#allocation8 + $0x5c] sm:$0xf]
        %v618 = vld [vmem:[#allocation8 + $0x60] sm:$0xff]
        %v619 = vld [vmem:[#allocation8 + $0x68] sm:$0xf]
        %v620 = vld [vmem:[#allocation8 + $0x6c] sm:$0xff]
        %v621 = vld [vmem:[#allocation8 + $0x74] sm:$0xf]
        %v622 = vld [vmem:[#allocation8 + $0x78] sm:$0xff]
        %v623 = vld [vmem:[#allocation8 + $0x80] sm:$0xf]
        %v624 = vld [vmem:[#allocation8 + $0x84] sm:$0xff]
        %v625 = vld [vmem:[#allocation8 + $0x8c] sm:$0xf]
        %v626 = vld [vmem:[#allocation8 + $0x90] sm:$0xff]
        %v627 = vld [vmem:[#allocation8 + $0x98] sm:$0xf]
        %v628 = vld [vmem:[#allocation8 + $0x9c] sm:$0xff]
        %v629 = vld [vmem:[#allocation8 + $0xa4] sm:$0xf]
        %v630 = vld [vmem:[#allocation8 + $0xa8] sm:$0xff]
        %v631 = vld [vmem:[#allocation8 + $0xb0] sm:$0xf]
        %v632 = vld [vmem:[#allocation8 + $0xb4] sm:$0xff]
        %v633 = vld [vmem:[#allocation8 + $0xbc] sm:$0xf]
        %v634 = vld [vmem:[%s5] sm:$0x7]
        %v636 = vlaneseq
        %v637 = vshrl.u32 %v636, 7
        %v638 = vsub.s32 0, %v637
        %v639 = vrot.slane %v634, %v638
        %v640 = vlaneseq
        %v641 = vshrl.u32 %v640, 7
        %v642 = vsub.s32 1, %v641
        %v643 = vrot.slane %v634, %v642
        %v644 = vlaneseq
        %v645 = vshrl.u32 %v644, 7
        %v646 = vsub.s32 2, %v645
        %v647 = vrot.slane %v634, %v646
        %v683 = vunpack.c.l.b16 %v602
        %v684 = vunpack.c.h.b16 %v602
        %v685 = vunpack.c.l.b16 %v603
        %v686 = vunpack.c.l.b16 %v604
        %v687 = vunpack.c.h.b16 %v604
        %v688 = vunpack.c.l.b16 %v605
        %v689 = vunpack.c.l.b16 %v606
        %v690 = vunpack.c.h.b16 %v606
        %v691 = vunpack.c.l.b16 %v607
        %v692 = vunpack.c.l.b16 %v608
        %v693 = vunpack.c.h.b16 %v608
        %v694 = vunpack.c.l.b16 %v609
        %v695 = vunpack.c.l.b16 %v610
        %v696 = vunpack.c.h.b16 %v610
        %v697 = vunpack.c.l.b16 %v611
        %v698 = vunpack.c.l.b16 %v612
        %v699 = vunpack.c.h.b16 %v612
        %v700 = vunpack.c.l.b16 %v613
        %v701 = vunpack.c.l.b16 %v614
        %v702 = vunpack.c.h.b16 %v614
        %v703 = vunpack.c.l.b16 %v615
        %v704 = vunpack.c.l.b16 %v616
        %v705 = vunpack.c.h.b16 %v616
        %v706 = vunpack.c.l.b16 %v617
        %v707 = vunpack.c.l.b16 %v618
        %v708 = vunpack.c.h.b16 %v618
        %v709 = vunpack.c.l.b16 %v619
        %v710 = vunpack.c.l.b16 %v620
        %v711 = vunpack.c.h.b16 %v620
        %v712 = vunpack.c.l.b16 %v621
        %v713 = vunpack.c.l.b16 %v622
        %v714 = vunpack.c.h.b16 %v622
        %v715 = vunpack.c.l.b16 %v623
        %v716 = vunpack.c.l.b16 %v624
        %v717 = vunpack.c.h.b16 %v624
        %v718 = vunpack.c.l.b16 %v625
        %v719 = vunpack.c.l.b16 %v626
        %v720 = vunpack.c.h.b16 %v626
        %v721 = vunpack.c.l.b16 %v627
        %v722 = vunpack.c.l.b16 %v628
        %v723 = vunpack.c.h.b16 %v628
        %v724 = vunpack.c.l.b16 %v629
        %v725 = vunpack.c.l.b16 %v630
        %v726 = vunpack.c.h.b16 %v630
        %v727 = vunpack.c.l.b16 %v631
        %v728 = vunpack.c.l.b16 %v632
        %v729 = vunpack.c.h.b16 %v632
        %v730 = vunpack.c.l.b16 %v633
        %v731 = vpack.c.b16 %v686, %v683
        %v732 = vpack.c.b16 %v687, %v684
        %v733 = vpack.c.b16 %v688, %v685
        %v734 = vpack.c.b16 %v692, %v689
        %v735 = vpack.c.b16 %v693, %v690
        %v736 = vpack.c.b16 %v694, %v691
        %v737 = vpack.c.b16 %v698, %v695
        %v738 = vpack.c.b16 %v699, %v696
        %v739 = vpack.c.b16 %v700, %v697
        %v740 = vpack.c.b16 %v704, %v701
        %v741 = vpack.c.b16 %v705, %v702
        %v742 = vpack.c.b16 %v706, %v703
        %v743 = vpack.c.b16 %v710, %v707
        %v744 = vpack.c.b16 %v711, %v708
        %v745 = vpack.c.b16 %v712, %v709
        %v746 = vpack.c.b16 %v716, %v713
        %v747 = vpack.c.b16 %v717, %v714
        %v748 = vpack.c.b16 %v718, %v715
        %v749 = vpack.c.b16 %v722, %v719
        %v750 = vpack.c.b16 %v723, %v720
        %v751 = vpack.c.b16 %v724, %v721
        %v752 = vpack.c.b16 %v728, %v725
        %v753 = vpack.c.b16 %v729, %v726
        %v754 = vpack.c.b16 %v730, %v727
        %779 = vmatprep.subr.bf16.mxu0 %v732
        %780 = vmatpush1.bf16.msra.mxu0 %v731
        %781 = vmatprep.subr.bf16.mxu0 %v735
        %782 = vmatpush1.bf16.msra.mxu0 %v734
        %783 = vmatprep.subr.bf16.mxu0 %v738
        %784 = vmatpush1.bf16.msra.mxu0 %v737
        %785 = vmatprep.subr.bf16.mxu0 %v741
        %786 = vmatpush1.bf16.msra.mxu0 %v740
        %787 = vmatprep.subr.bf16.mxu0 %v744
        %788 = vmatpush1.bf16.msra.mxu0 %v743
        %789 = vmatprep.subr.bf16.mxu0 %v747
        %790 = vmatpush1.bf16.msra.mxu0 %v746
        %791 = vmatprep.subr.bf16.mxu0 %v750
        %792 = vmatpush1.bf16.msra.mxu0 %v749
        %793 = vmatprep.subr.bf16.mxu0 %v753
        %794 = vmatpush1.bf16.msra.mxu0 %v752
        %795 = vmatprep.subr.bf16.mxu0 0
        %796 = vmatpush1.bf16.msra.mxu0 0
        %797 = vmatprep.subr.bf16.mxu0 0
        %798 = vmatpush1.bf16.msra.mxu0 0
        %799 = vmatprep.subr.bf16.mxu0 0
        %800 = vmatpush1.bf16.msra.mxu0 0
        %801 = vmatprep.subr.bf16.mxu0 0
        %802 = vmatpush1.bf16.msra.mxu0 0
        %803 = vmatprep.subr.bf16.mxu0 0
        %804 = vmatpush1.bf16.msra.mxu0 0
        %805 = vmatprep.subr.bf16.mxu0 0
        %806 = vmatpush1.bf16.msra.mxu0 0
        %807 = vmatprep.subr.bf16.mxu0 0
        %808 = vmatpush1.bf16.msra.mxu0 0
        %809 = vmatprep.subr.bf16.mxu0 0
        %810 = vmatpush1.bf16.msra.mxu0 0
        %811 = vmatprep.mubr.bf16.mxu0 0
        %812 = vmatmul.mubr.bf16.gmra.mrb[0].mxu0 %v601
        %v813 = vpop.f32.mrb[0].mxu0
        %v814 = vadd.f32 %v639, %v813
        %v815 = vpop.f32.mrb[0].mxu0
        %v816 = vadd.f32 %v643, %v815
        %v817 = vpop.f32.mrb[0].mxu0
        %v818 = vpop.f32.mrb[0].mxu0
        %819 = vdwg.mxu0
        %820 = vmatprep.subr.bf16.mxu0 0
        %821 = vmatpush1.bf16.msra.mxu0 %v733
        %822 = vmatprep.subr.bf16.mxu0 0
        %823 = vmatpush1.bf16.msra.mxu0 %v736
        %824 = vmatprep.subr.bf16.mxu0 0
        %825 = vmatpush1.bf16.msra.mxu0 %v739
        %826 = vmatprep.subr.bf16.mxu0 0
        %827 = vmatpush1.bf16.msra.mxu0 %v742
        %828 = vmatprep.subr.bf16.mxu0 0
        %829 = vmatpush1.bf16.msra.mxu0 %v745
        %830 = vmatprep.subr.bf16.mxu0 0
        %831 = vmatpush1.bf16.msra.mxu0 %v748
        %832 = vmatprep.subr.bf16.mxu0 0
        %833 = vmatpush1.bf16.msra.mxu0 %v751
        %834 = vmatprep.subr.bf16.mxu0 0
        %835 = vmatpush1.bf16.msra.mxu0 %v754
        %836 = vmatprep.subr.bf16.mxu0 0
        %837 = vmatpush1.bf16.msra.mxu0 0
        %838 = vmatprep.subr.bf16.mxu0 0
        %839 = vmatpush1.bf16.msra.mxu0 0
        %840 = vmatprep.subr.bf16.mxu0 0
        %841 = vmatpush1.bf16.msra.mxu0 0
        %842 = vmatprep.subr.bf16.mxu0 0
        %843 = vmatpush1.bf16.msra.mxu0 0
        %844 = vmatprep.subr.bf16.mxu0 0
        %845 = vmatpush1.bf16.msra.mxu0 0
        %846 = vmatprep.subr.bf16.mxu0 0
        %847 = vmatpush1.bf16.msra.mxu0 0
        %848 = vmatprep.subr.bf16.mxu0 0
        %849 = vmatpush1.bf16.msra.mxu0 0
        %850 = vmatprep.subr.bf16.mxu0 0
        %851 = vmatpush1.bf16.msra.mxu0 0
        %852 = vmatprep.mubr.bf16.mxu0 0
        %853 = vmatmul.mubr.bf16.gmra.mrb[0].mxu0 %v601
        %v854 = vpop.f32.mrb[0].mxu0
        %v855 = vadd.f32 %v647, %v854
        %v856 = vpop.f32.mrb[0].mxu0
        %v857 = vpop.f32.mrb[0].mxu0
        %v858 = vpop.f32.mrb[0].mxu0
        %859 = vdwg.mxu0
        %v860 = vmul.f32 %v814, 0.17677669
        %v861 = vpack.c.bf16 %v860, %v860
        %v862 = vpack.c.bf16 %v816, %v816
        %v863 = vpack.c.bf16 %v855, %v855
        %v865 = vlaneseq
        %v866 = vshrl.u32 %v865, 7
        %v867 = vsub.s32 0, %v866
        %v868 = vrot.slane %v572, %v867
        %vm870 = vcmask 261120
        %v872 = vsel %vm870, %v861, 0
        %v875 = vsel %vm870, %v862, 0
        %877 = vmatprep.subr.bf16.mxu0 0
        %878 = vmatpush1.bf16.xpose.msra.mxu0 %v875
        %879 = vmatprep.subr.bf16.mxu0 0
        %880 = vmatpush1.bf16.xpose.msra.mxu0 0
        %881 = vmatprep.subr.bf16.mxu0 0
        %882 = vmatpush1.bf16.xpose.msra.mxu0 0
        %883 = vmatprep.subr.bf16.mxu0 0
        %884 = vmatpush1.bf16.xpose.msra.mxu0 0
        %885 = vmatprep.subr.bf16.mxu0 0
        %886 = vmatpush1.bf16.xpose.msra.mxu0 0
        %887 = vmatprep.subr.bf16.mxu0 0
        %888 = vmatpush1.bf16.xpose.msra.mxu0 0
        %889 = vmatprep.subr.bf16.mxu0 0
        %890 = vmatpush1.bf16.xpose.msra.mxu0 0
        %891 = vmatprep.subr.bf16.mxu0 0
        %892 = vmatpush1.bf16.xpose.msra.mxu0 0
        %893 = vmatprep.subr.bf16.mxu0 0
        %894 = vmatpush1.bf16.xpose.msra.mxu0 0
        %895 = vmatprep.subr.bf16.mxu0 0
        %896 = vmatpush1.bf16.xpose.msra.mxu0 0
        %897 = vmatprep.subr.bf16.mxu0 0
        %898 = vmatpush1.bf16.xpose.msra.mxu0 0
        %899 = vmatprep.subr.bf16.mxu0 0
        %900 = vmatpush1.bf16.xpose.msra.mxu0 0
        %901 = vmatprep.subr.bf16.mxu0 0
        %902 = vmatpush1.bf16.xpose.msra.mxu0 0
        %903 = vmatprep.subr.bf16.mxu0 0
        %904 = vmatpush1.bf16.xpose.msra.mxu0 0
        %905 = vmatprep.subr.bf16.mxu0 0
        %906 = vmatpush1.bf16.xpose.msra.mxu0 0
        %907 = vmatprep.subr.bf16.mxu0 0
        %908 = vmatpush1.bf16.xpose.msra.mxu0 0
        %909 = vmatprep.mubr.bf16.mxu0 0
        %910 = vmatmul.mubr.bf16.gmra.mrb[0].mxu0 %v872
        %v911 = vpop.f32.mrb[0].mxu0
        %v912 = vadd.f32 %v868, %v911
        %v913 = vpop.f32.mrb[0].mxu0
        %v914 = vpop.f32.mrb[0].mxu0
        %v915 = vpop.f32.mrb[0].mxu0
        %916 = vdwg.mxu0
        %vm917 = vcmask 64512
        %v918 = vsel %vm917, %v912, -inf
        %919 = vmax.xlane.f32.xlu0 %v918
        %v920 = vpop.xlane.xlu0 %919
        %v921 = vsub.f32 %v912, %v920
        %v922 = vmul.f32 %v921, 1.442695
        %v923 = vpow.pop %v922
        %v924 = vsel %vm917, %v923, 0.0
        %925 = vadd.xlane.f32.xlu0 %v924
        %v926 = vpop.xlane.xlu0 %925
        %v927 = vrcp.pop %v926
        %v928 = vmul.f32 %v923, %v927
        %v929 = vpack.c.bf16 %v928, %v928
        %v931 = vsel %vm917, %v929, 0
        %vm933 = vcmask 1043456
        %v935 = vsel %vm933, %v863, 0
        %937 = vmatprep.subr.bf16.mxu0 0
        %938 = vmatpush1.bf16.msra.mxu0 %v935
        %939 = vmatprep.subr.bf16.mxu0 0
        %940 = vmatpush1.bf16.msra.mxu0 0
        %941 = vmatprep.subr.bf16.mxu0 0
        %942 = vmatpush1.bf16.msra.mxu0 0
        %943 = vmatprep.subr.bf16.mxu0 0
        %944 = vmatpush1.bf16.msra.mxu0 0
        %945 = vmatprep.subr.bf16.mxu0 0
        %946 = vmatpush1.bf16.msra.mxu0 0
        %947 = vmatprep.subr.bf16.mxu0 0
        %948 = vmatpush1.bf16.msra.mxu0 0
        %949 = vmatprep.subr.bf16.mxu0 0
        %950 = vmatpush1.bf16.msra.mxu0 0
        %951 = vmatprep.subr.bf16.mxu0 0
        %952 = vmatpush1.bf16.msra.mxu0 0
        %953 = vmatprep.subr.bf16.mxu0 0
        %954 = vmatpush1.bf16.msra.mxu0 0
        %955 = vmatprep.subr.bf16.mxu0 0
        %956 = vmatpush1.bf16.msra.mxu0 0
        %957 = vmatprep.subr.bf16.mxu0 0
        %958 = vmatpush1.bf16.msra.mxu0 0
        %959 = vmatprep.subr.bf16.mxu0 0
        %960 = vmatpush1.bf16.msra.mxu0 0
        %961 = vmatprep.subr.bf16.mxu0 0
        %962 = vmatpush1.bf16.msra.mxu0 0
        %963 = vmatprep.subr.bf16.mxu0 0
        %964 = vmatpush1.bf16.msra.mxu0 0
        %965 = vmatprep.subr.bf16.mxu0 0
        %966 = vmatpush1.bf16.msra.mxu0 0
        %967 = vmatprep.subr.bf16.mxu0 0
        %968 = vmatpush1.bf16.msra.mxu0 0
        %969 = vmatprep.mubr.bf16.mxu0 0
        %970 = vmatmul.mubr.bf16.gmra.mrb[0].mxu0 %v931
        %v971 = vpop.f32.mrb[0].mxu0
        %v972 = vadd.f32 0.0, %v971
        %v973 = vpop.f32.mrb[0].mxu0
        %v974 = vpop.f32.mrb[0].mxu0
        %v975 = vpop.f32.mrb[0].mxu0
        %976 = vdwg.mxu0
        %977 = vst.msk [vmem:[#allocation2] sm:$0xff] %vm870, %v972
        %979 = vrot.lane.b32.xlu0 %v861, 96
        %v980 = vpop.permute.xlu0 %979
        %982 = vrot.lane.b32.xlu0 %v862, 96
        %v983 = vpop.permute.xlu0 %982
        %v985 = vsel %vm870, %v980, 0
        %v988 = vsel %vm870, %v983, 0
        %990 = vmatprep.subr.bf16.mxu0 0
        %991 = vmatpush1.bf16.xpose.msra.mxu0 %v988
        %992 = vmatprep.subr.bf16.mxu0 0
        %993 = vmatpush1.bf16.xpose.msra.mxu0 0
        %994 = vmatprep.subr.bf16.mxu0 0
        %995 = vmatpush1.bf16.xpose.msra.mxu0 0
        %996 = vmatprep.subr.bf16.mxu0 0
        %997 = vmatpush1.bf16.xpose.msra.mxu0 0
        %998 = vmatprep.subr.bf16.mxu0 0
        %999 = vmatpush1.bf16.xpose.msra.mxu0 0
        %1000 = vmatprep.subr.bf16.mxu0 0
        %1001 = vmatpush1.bf16.xpose.msra.mxu0 0
        %1002 = vmatprep.subr.bf16.mxu0 0
        %1003 = vmatpush1.bf16.xpose.msra.mxu0 0
        %1004 = vmatprep.subr.bf16.mxu0 0
        %1005 = vmatpush1.bf16.xpose.msra.mxu0 0
        %1006 = vmatprep.subr.bf16.mxu0 0
        %1007 = vmatpush1.bf16.xpose.msra.mxu0 0
        %1008 = vmatprep.subr.bf16.mxu0 0
        %1009 = vmatpush1.bf16.xpose.msra.mxu0 0
        %1010 = vmatprep.subr.bf16.mxu0 0
        %1011 = vmatpush1.bf16.xpose.msra.mxu0 0
        %1012 = vmatprep.subr.bf16.mxu0 0
        %1013 = vmatpush1.bf16.xpose.msra.mxu0 0
        %1014 = vmatprep.subr.bf16.mxu0 0
        %1015 = vmatpush1.bf16.xpose.msra.mxu0 0
        %1016 = vmatprep.subr.bf16.mxu0 0
        %1017 = vmatpush1.bf16.xpose.msra.mxu0 0
        %1018 = vmatprep.subr.bf16.mxu0 0
        %1019 = vmatpush1.bf16.xpose.msra.mxu0 0
        %1020 = vmatprep.subr.bf16.mxu0 0
        %1021 = vmatpush1.bf16.xpose.msra.mxu0 0
        %1022 = vmatprep.mubr.bf16.mxu0 0
        %1023 = vmatmul.mubr.bf16.gmra.mrb[0].mxu0 %v985
        %v1024 = vpop.f32.mrb[0].mxu0
        %v1025 = vadd.f32 %v868, %v1024
        %v1026 = vpop.f32.mrb[0].mxu0
        %v1027 = vpop.f32.mrb[0].mxu0
        %v1028 = vpop.f32.mrb[0].mxu0
        %1029 = vdwg.mxu0
        %v1030 = vsel %vm917, %v1025, -inf
        %1031 = vmax.xlane.f32.xlu0 %v1030
        %v1032 = vpop.xlane.xlu0 %1031
        %v1033 = vsub.f32 %v1025, %v1032
        %v1034 = vmul.f32 %v1033, 1.442695
        %v1035 = vpow.pop %v1034
        %v1036 = vsel %vm917, %v1035, 0.0
        %1037 = vadd.xlane.f32.xlu0 %v1036
        %v1038 = vpop.xlane.xlu0 %1037
        %v1039 = vrcp.pop %v1038
        %v1040 = vmul.f32 %v1035, %v1039
        %v1041 = vpack.c.bf16 %v1040, %v1040
        %1043 = vrot.lane.b32.xlu0 %v863, 96
        %v1044 = vpop.permute.xlu0 %1043
        %v1046 = vsel %vm917, %v1041, 0
        %v1049 = vsel %vm933, %v1044, 0
        %1051 = vmatprep.subr.bf16.mxu0 0
        %1052 = vmatpush1.bf16.msra.mxu0 %v1049
        %1053 = vmatprep.subr.bf16.mxu0 0
        %1054 = vmatpush1.bf16.msra.mxu0 0
        %1055 = vmatprep.subr.bf16.mxu0 0
        %1056 = vmatpush1.bf16.msra.mxu0 0
        %1057 = vmatprep.subr.bf16.mxu0 0
        %1058 = vmatpush1.bf16.msra.mxu0 0
        %1059 = vmatprep.subr.bf16.mxu0 0
        %1060 = vmatpush1.bf16.msra.mxu0 0
        %1061 = vmatprep.subr.bf16.mxu0 0
        %1062 = vmatpush1.bf16.msra.mxu0 0
        %1063 = vmatprep.subr.bf16.mxu0 0
        %1064 = vmatpush1.bf16.msra.mxu0 0
        %1065 = vmatprep.subr.bf16.mxu0 0
        %1066 = vmatpush1.bf16.msra.mxu0 0
        %1067 = vmatprep.subr.bf16.mxu0 0
        %1068 = vmatpush1.bf16.msra.mxu0 0
        %1069 = vmatprep.subr.bf16.mxu0 0
        %1070 = vmatpush1.bf16.msra.mxu0 0
        %1071 = vmatprep.subr.bf16.mxu0 0
        %1072 = vmatpush1.bf16.msra.mxu0 0
        %1073 = vmatprep.subr.bf16.mxu0 0
        %1074 = vmatpush1.bf16.msra.mxu0 0
        %1075 = vmatprep.subr.bf16.mxu0 0
        %1076 = vmatpush1.bf16.msra.mxu0 0
        %1077 = vmatprep.subr.bf16.mxu0 0
        %1078 = vmatpush1.bf16.msra.mxu0 0
        %1079 = vmatprep.subr.bf16.mxu0 0
        %1080 = vmatpush1.bf16.msra.mxu0 0
        %1081 = vmatprep.subr.bf16.mxu0 0
        %1082 = vmatpush1.bf16.msra.mxu0 0
        %1083 = vmatprep.mubr.bf16.mxu0 0
        %1084 = vmatmul.mubr.bf16.gmra.mrb[0].mxu0 %v1046
        %v1085 = vpop.f32.mrb[0].mxu0
        %v1086 = vadd.f32 0.0, %v1085
        %v1087 = vpop.f32.mrb[0].mxu0
        %v1088 = vpop.f32.mrb[0].mxu0
        %v1089 = vpop.f32.mrb[0].mxu0
        %1090 = vdwg.mxu0
        %1092 = vrot.lane.b32.xlu0 %v1086, 32
        %v1093 = vpop.permute.xlu0 %1092
        %vm1095 = vcmask 523520
        %1096 = vst.msk [vmem:[#allocation2] sm:$0xff] %vm1095, %v1093
        %1097 = vrot.lane.b32.xlu0 %v861, 64
        %v1098 = vpop.permute.xlu0 %1097
        %1099 = vrot.lane.b32.xlu0 %v862, 64
        %v1100 = vpop.permute.xlu0 %1099
        %v1102 = vsel %vm870, %v1098, 0
        %v1105 = vsel %vm870, %v1100, 0
        %1107 = vmatprep.subr.bf16.mxu0 0
        %1108 = vmatpush1.bf16.xpose.msra.mxu0 %v1105
        %1109 = vmatprep.subr.bf16.mxu0 0
        %1110 = vmatpush1.bf16.xpose.msra.mxu0 0
        %1111 = vmatprep.subr.bf16.mxu0 0
        %1112 = vmatpush1.bf16.xpose.msra.mxu0 0
        %1113 = vmatprep.subr.bf16.mxu0 0
        %1114 = vmatpush1.bf16.xpose.msra.mxu0 0
        %1115 = vmatprep.subr.bf16.mxu0 0
        %1116 = vmatpush1.bf16.xpose.msra.mxu0 0
        %1117 = vmatprep.subr.bf16.mxu0 0
        %1118 = vmatpush1.bf16.xpose.msra.mxu0 0
        %1119 = vmatprep.subr.bf16.mxu0 0
        %1120 = vmatpush1.bf16.xpose.msra.mxu0 0
        %1121 = vmatprep.subr.bf16.mxu0 0
        %1122 = vmatpush1.bf16.xpose.msra.mxu0 0
        %1123 = vmatprep.subr.bf16.mxu0 0
        %1124 = vmatpush1.bf16.xpose.msra.mxu0 0
        %1125 = vmatprep.subr.bf16.mxu0 0
        %1126 = vmatpush1.bf16.xpose.msra.mxu0 0
        %1127 = vmatprep.subr.bf16.mxu0 0
        %1128 = vmatpush1.bf16.xpose.msra.mxu0 0
        %1129 = vmatprep.subr.bf16.mxu0 0
        %1130 = vmatpush1.bf16.xpose.msra.mxu0 0
        %1131 = vmatprep.subr.bf16.mxu0 0
        %1132 = vmatpush1.bf16.xpose.msra.mxu0 0
        %1133 = vmatprep.subr.bf16.mxu0 0
        %1134 = vmatpush1.bf16.xpose.msra.mxu0 0
        %1135 = vmatprep.subr.bf16.mxu0 0
        %1136 = vmatpush1.bf16.xpose.msra.mxu0 0
        %1137 = vmatprep.subr.bf16.mxu0 0
        %1138 = vmatpush1.bf16.xpose.msra.mxu0 0
        %1139 = vmatprep.mubr.bf16.mxu0 0
        %1140 = vmatmul.mubr.bf16.gmra.mrb[0].mxu0 %v1102
        %v1141 = vpop.f32.mrb[0].mxu0
        %v1142 = vadd.f32 %v868, %v1141
        %v1143 = vpop.f32.mrb[0].mxu0
        %v1144 = vpop.f32.mrb[0].mxu0
        %v1145 = vpop.f32.mrb[0].mxu0
        %1146 = vdwg.mxu0
        %v1147 = vsel %vm917, %v1142, -inf
        %1148 = vmax.xlane.f32.xlu0 %v1147
        %v1149 = vpop.xlane.xlu0 %1148
        %v1150 = vsub.f32 %v1142, %v1149
        %v1151 = vmul.f32 %v1150, 1.442695
        %v1152 = vpow.pop %v1151
        %v1153 = vsel %vm917, %v1152, 0.0
        %1154 = vadd.xlane.f32.xlu0 %v1153
        %v1155 = vpop.xlane.xlu0 %1154
        %v1156 = vrcp.pop %v1155
        %v1157 = vmul.f32 %v1152, %v1156
        %v1158 = vpack.c.bf16 %v1157, %v1157
        %1159 = vrot.lane.b32.xlu0 %v863, 64
        %v1160 = vpop.permute.xlu0 %1159
        %v1162 = vsel %vm917, %v1158, 0
        %v1165 = vsel %vm933, %v1160, 0
        %1167 = vmatprep.subr.bf16.mxu0 0
        %1168 = vmatpush1.bf16.msra.mxu0 %v1165
        %1169 = vmatprep.subr.bf16.mxu0 0
        %1170 = vmatpush1.bf16.msra.mxu0 0
        %1171 = vmatprep.subr.bf16.mxu0 0
        %1172 = vmatpush1.bf16.msra.mxu0 0
        %1173 = vmatprep.subr.bf16.mxu0 0
        %1174 = vmatpush1.bf16.msra.mxu0 0
        %1175 = vmatprep.subr.bf16.mxu0 0
        %1176 = vmatpush1.bf16.msra.mxu0 0
        %1177 = vmatprep.subr.bf16.mxu0 0
        %1178 = vmatpush1.bf16.msra.mxu0 0
        %1179 = vmatprep.subr.bf16.mxu0 0
        %1180 = vmatpush1.bf16.msra.mxu0 0
        %1181 = vmatprep.subr.bf16.mxu0 0
        %1182 = vmatpush1.bf16.msra.mxu0 0
        %1183 = vmatprep.subr.bf16.mxu0 0
        %1184 = vmatpush1.bf16.msra.mxu0 0
        %1185 = vmatprep.subr.bf16.mxu0 0
        %1186 = vmatpush1.bf16.msra.mxu0 0
        %1187 = vmatprep.subr.bf16.mxu0 0
        %1188 = vmatpush1.bf16.msra.mxu0 0
        %1189 = vmatprep.subr.bf16.mxu0 0
        %1190 = vmatpush1.bf16.msra.mxu0 0
        %1191 = vmatprep.subr.bf16.mxu0 0
        %1192 = vmatpush1.bf16.msra.mxu0 0
        %1193 = vmatprep.subr.bf16.mxu0 0
        %1194 = vmatpush1.bf16.msra.mxu0 0
        %1195 = vmatprep.subr.bf16.mxu0 0
        %1196 = vmatpush1.bf16.msra.mxu0 0
        %1197 = vmatprep.subr.bf16.mxu0 0
        %1198 = vmatpush1.bf16.msra.mxu0 0
        %1199 = vmatprep.mubr.bf16.mxu0 0
        %1200 = vmatmul.mubr.bf16.gmra.mrb[0].mxu0 %v1162
        %v1201 = vpop.f32.mrb[0].mxu0
        %v1202 = vadd.f32 0.0, %v1201
        %v1203 = vpop.f32.mrb[0].mxu0
        %v1204 = vpop.f32.mrb[0].mxu0
        %v1205 = vpop.f32.mrb[0].mxu0
        %1206 = vdwg.mxu0
        %1208 = vrot.lane.b32.xlu0 %v1202, 64
        %v1209 = vpop.permute.xlu0 %1208
        %vm1211 = vcmask 785920
        %1212 = vst.msk [vmem:[#allocation2] sm:$0xff] %vm1211, %v1209
        %1213 = vrot.lane.b32.xlu0 %v861, 32
        %v1214 = vpop.permute.xlu0 %1213
        %1215 = vrot.lane.b32.xlu0 %v862, 32
        %v1216 = vpop.permute.xlu0 %1215
        %v1218 = vsel %vm870, %v1214, 0
        %v1221 = vsel %vm870, %v1216, 0
        %1223 = vmatprep.subr.bf16.mxu0 0
        %1224 = vmatpush1.bf16.xpose.msra.mxu0 %v1221
        %1225 = vmatprep.subr.bf16.mxu0 0
        %1226 = vmatpush1.bf16.xpose.msra.mxu0 0
        %1227 = vmatprep.subr.bf16.mxu0 0
        %1228 = vmatpush1.bf16.xpose.msra.mxu0 0
        %1229 = vmatprep.subr.bf16.mxu0 0
        %1230 = vmatpush1.bf16.xpose.msra.mxu0 0
        %1231 = vmatprep.subr.bf16.mxu0 0
        %1232 = vmatpush1.bf16.xpose.msra.mxu0 0
        %1233 = vmatprep.subr.bf16.mxu0 0
        %1234 = vmatpush1.bf16.xpose.msra.mxu0 0
        %1235 = vmatprep.subr.bf16.mxu0 0
        %1236 = vmatpush1.bf16.xpose.msra.mxu0 0
        %1237 = vmatprep.subr.bf16.mxu0 0
        %1238 = vmatpush1.bf16.xpose.msra.mxu0 0
        %1239 = vmatprep.subr.bf16.mxu0 0
        %1240 = vmatpush1.bf16.xpose.msra.mxu0 0
        %1241 = vmatprep.subr.bf16.mxu0 0
        %1242 = vmatpush1.bf16.xpose.msra.mxu0 0
        %1243 = vmatprep.subr.bf16.mxu0 0
        %1244 = vmatpush1.bf16.xpose.msra.mxu0 0
        %1245 = vmatprep.subr.bf16.mxu0 0
        %1246 = vmatpush1.bf16.xpose.msra.mxu0 0
        %1247 = vmatprep.subr.bf16.mxu0 0
        %1248 = vmatpush1.bf16.xpose.msra.mxu0 0
        %1249 = vmatprep.subr.bf16.mxu0 0
        %1250 = vmatpush1.bf16.xpose.msra.mxu0 0
        %1251 = vmatprep.subr.bf16.mxu0 0
        %1252 = vmatpush1.bf16.xpose.msra.mxu0 0
        %1253 = vmatprep.subr.bf16.mxu0 0
        %1254 = vmatpush1.bf16.xpose.msra.mxu0 0
        %1255 = vmatprep.mubr.bf16.mxu0 0
        %1256 = vmatmul.mubr.bf16.gmra.mrb[0].mxu0 %v1218
        %v1257 = vpop.f32.mrb[0].mxu0
        %v1258 = vadd.f32 %v868, %v1257
        %v1259 = vpop.f32.mrb[0].mxu0
        %v1260 = vpop.f32.mrb[0].mxu0
        %v1261 = vpop.f32.mrb[0].mxu0
        %1262 = vdwg.mxu0
        %v1263 = vsel %vm917, %v1258, -inf
        %1264 = vmax.xlane.f32.xlu0 %v1263
        %v1265 = vpop.xlane.xlu0 %1264
        %v1266 = vsub.f32 %v1258, %v1265
        %v1267 = vmul.f32 %v1266, 1.442695
        %v1268 = vpow.pop %v1267
        %v1269 = vsel %vm917, %v1268, 0.0
        %1270 = vadd.xlane.f32.xlu0 %v1269
        %v1271 = vpop.xlane.xlu0 %1270
        %v1272 = vrcp.pop %v1271
        %v1273 = vmul.f32 %v1268, %v1272
        %v1274 = vpack.c.bf16 %v1273, %v1273
        %1275 = vrot.lane.b32.xlu0 %v863, 32
        %v1276 = vpop.permute.xlu0 %1275
        %v1278 = vsel %vm917, %v1274, 0
        %v1281 = vsel %vm933, %v1276, 0
        %1283 = vmatprep.subr.bf16.mxu0 0
        %1284 = vmatpush1.bf16.msra.mxu0 %v1281
        %1285 = vmatprep.subr.bf16.mxu0 0
        %1286 = vmatpush1.bf16.msra.mxu0 0
        %1287 = vmatprep.subr.bf16.mxu0 0
        %1288 = vmatpush1.bf16.msra.mxu0 0
        %1289 = vmatprep.subr.bf16.mxu0 0
        %1290 = vmatpush1.bf16.msra.mxu0 0
        %1291 = vmatprep.subr.bf16.mxu0 0
        %1292 = vmatpush1.bf16.msra.mxu0 0
        %1293 = vmatprep.subr.bf16.mxu0 0
        %1294 = vmatpush1.bf16.msra.mxu0 0
        %1295 = vmatprep.subr.bf16.mxu0 0
        %1296 = vmatpush1.bf16.msra.mxu0 0
        %1297 = vmatprep.subr.bf16.mxu0 0
        %1298 = vmatpush1.bf16.msra.mxu0 0
        %1299 = vmatprep.subr.bf16.mxu0 0
        %1300 = vmatpush1.bf16.msra.mxu0 0
        %1301 = vmatprep.subr.bf16.mxu0 0
        %1302 = vmatpush1.bf16.msra.mxu0 0
        %1303 = vmatprep.subr.bf16.mxu0 0
        %1304 = vmatpush1.bf16.msra.mxu0 0
        %1305 = vmatprep.subr.bf16.mxu0 0
        %1306 = vmatpush1.bf16.msra.mxu0 0
        %1307 = vmatprep.subr.bf16.mxu0 0
        %1308 = vmatpush1.bf16.msra.mxu0 0
        %1309 = vmatprep.subr.bf16.mxu0 0
        %1310 = vmatpush1.bf16.msra.mxu0 0
        %1311 = vmatprep.subr.bf16.mxu0 0
        %1312 = vmatpush1.bf16.msra.mxu0 0
        %1313 = vmatprep.subr.bf16.mxu0 0
        %1314 = vmatpush1.bf16.msra.mxu0 0
        %1315 = vmatprep.mubr.bf16.mxu0 0
        %1316 = vmatmul.mubr.bf16.gmra.mrb[0].mxu0 %v1278
        %v1317 = vpop.f32.mrb[0].mxu0
        %v1318 = vadd.f32 0.0, %v1317
        %v1319 = vpop.f32.mrb[0].mxu0
        %v1320 = vpop.f32.mrb[0].mxu0
        %v1321 = vpop.f32.mrb[0].mxu0
        %1322 = vdwg.mxu0
        %1324 = vrot.lane.b32.xlu0 %v1318, 96
        %v1325 = vpop.permute.xlu0 %1324
        %vm1327 = vcmask 1048320
        %1328 = vst.msk [vmem:[#allocation2] sm:$0xff] %vm1327, %v1325
        %v1329 = vld [vmem:[#allocation2] sm:$0xff]
        %v1330 = vpack.c.bf16 %v1329, %v1329
        %v1331 = vld [vmem:[#allocation9] sm:$0xf]
        %v1332 = vld [vmem:[#allocation9 + $0x4] sm:$0xf]
        %v1333 = vld [vmem:[#allocation9 + $0x8] sm:$0xf]
        %v1334 = vld [vmem:[#allocation9 + $0xc] sm:$0xf]
        %v1335 = vld [vmem:[#allocation9 + $0x10] sm:$0xf]
        %v1336 = vld [vmem:[#allocation9 + $0x14] sm:$0xf]
        %v1337 = vld [vmem:[#allocation9 + $0x18] sm:$0xf]
        %v1338 = vld [vmem:[#allocation9 + $0x1c] sm:$0xf]
        %v1339 = vld [vmem:[#allocation9 + $0x20] sm:$0xf]
        %v1340 = vld [vmem:[#allocation9 + $0x24] sm:$0xf]
        %v1341 = vld [vmem:[#allocation9 + $0x28] sm:$0xf]
        %v1342 = vld [vmem:[#allocation9 + $0x2c] sm:$0xf]
        %v1343 = vld [vmem:[#allocation9 + $0x30] sm:$0xf]
        %v1344 = vld [vmem:[#allocation9 + $0x34] sm:$0xf]
        %v1345 = vld [vmem:[#allocation9 + $0x38] sm:$0xf]
        %v1346 = vld [vmem:[#allocation9 + $0x3c] sm:$0xf]
        %v1347 = vld [vmem:[%s7] sm:$0x1]
        %v1349 = vlaneseq
        %v1350 = vshrl.u32 %v1349, 7
        %v1351 = vsub.s32 0, %v1350
        %v1352 = vrot.slane %v1347, %v1351
        %v1370 = vunpack.c.l.b16 %v1331
        %v1371 = vunpack.c.l.b16 %v1332
        %v1372 = vunpack.c.l.b16 %v1333
        %v1373 = vunpack.c.l.b16 %v1334
        %v1374 = vunpack.c.l.b16 %v1335
        %v1375 = vunpack.c.l.b16 %v1336
        %v1376 = vunpack.c.l.b16 %v1337
        %v1377 = vunpack.c.l.b16 %v1338
        %v1378 = vunpack.c.l.b16 %v1339
        %v1379 = vunpack.c.l.b16 %v1340
        %v1380 = vunpack.c.l.b16 %v1341
        %v1381 = vunpack.c.l.b16 %v1342
        %v1382 = vunpack.c.l.b16 %v1343
        %v1383 = vunpack.c.l.b16 %v1344
        %v1384 = vunpack.c.l.b16 %v1345
        %v1385 = vunpack.c.l.b16 %v1346
        %v1386 = vpack.c.b16 %v1371, %v1370
        %v1387 = vpack.c.b16 %v1373, %v1372
        %v1388 = vpack.c.b16 %v1375, %v1374
        %v1389 = vpack.c.b16 %v1377, %v1376
        %v1390 = vpack.c.b16 %v1379, %v1378
        %v1391 = vpack.c.b16 %v1381, %v1380
        %v1392 = vpack.c.b16 %v1383, %v1382
        %v1393 = vpack.c.b16 %v1385, %v1384
        %1402 = vmatprep.subr.bf16.mxu0 0
        %1403 = vmatpush1.bf16.msra.mxu0 %v1386
        %1404 = vmatprep.subr.bf16.mxu0 0
        %1405 = vmatpush1.bf16.msra.mxu0 %v1387
        %1406 = vmatprep.subr.bf16.mxu0 0
        %1407 = vmatpush1.bf16.msra.mxu0 %v1388
        %1408 = vmatprep.subr.bf16.mxu0 0
        %1409 = vmatpush1.bf16.msra.mxu0 %v1389
        %1410 = vmatprep.subr.bf16.mxu0 0
        %1411 = vmatpush1.bf16.msra.mxu0 %v1390
        %1412 = vmatprep.subr.bf16.mxu0 0
        %1413 = vmatpush1.bf16.msra.mxu0 %v1391
        %1414 = vmatprep.subr.bf16.mxu0 0
        %1415 = vmatpush1.bf16.msra.mxu0 %v1392
        %1416 = vmatprep.subr.bf16.mxu0 0
        %1417 = vmatpush1.bf16.msra.mxu0 %v1393
        %1418 = vmatprep.subr.bf16.mxu0 0
        %1419 = vmatpush1.bf16.msra.mxu0 0
        %1420 = vmatprep.subr.bf16.mxu0 0
        %1421 = vmatpush1.bf16.msra.mxu0 0
        %1422 = vmatprep.subr.bf16.mxu0 0
        %1423 = vmatpush1.bf16.msra.mxu0 0
        %1424 = vmatprep.subr.bf16.mxu0 0
        %1425 = vmatpush1.bf16.msra.mxu0 0
        %1426 = vmatprep.subr.bf16.mxu0 0
        %1427 = vmatpush1.bf16.msra.mxu0 0
        %1428 = vmatprep.subr.bf16.mxu0 0
        %1429 = vmatpush1.bf16.msra.mxu0 0
        %1430 = vmatprep.subr.bf16.mxu0 0
        %1431 = vmatpush1.bf16.msra.mxu0 0
        %1432 = vmatprep.subr.bf16.mxu0 0
        %1433 = vmatpush1.bf16.msra.mxu0 0
        %1434 = vmatprep.mubr.bf16.mxu0 0
        %1435 = vmatmul.mubr.bf16.gmra.mrb[0].mxu0 %v1330
        %v1436 = vpop.f32.mrb[0].mxu0
        %v1437 = vadd.f32 %v1352, %v1436
        %v1438 = vpop.f32.mrb[0].mxu0
        %v1439 = vpop.f32.mrb[0].mxu0
        %v1440 = vpop.f32.mrb[0].mxu0
        %1441 = vdwg.mxu0
        %v1442 = vadd.f32 %v569, %v1437
        %1443 = vadd.xlane.f32.xlu0 %v1442
        %v1444 = vpop.xlane.xlu0 %1443
        %v1445 = vmul.f32 %v1444, %v575
        %v1446 = vsub.f32 %v1442, %v1445
        %v1447 = vmul.f32 %v1446, %v1446
        %1448 = vadd.xlane.f32.xlu0 %v1447
        %v1449 = vpop.xlane.xlu0 %1448
        %v1450 = vmul.f32 %v1449, %v575
        %v1451 = vadd.f32 %v1450, 1e-06
        %v1452 = vrsqrt.pop %v1451
        %v1453 = vmul.f32 %v1446, %v1452
        %v1454 = vld [vmem:[%s8] sm:$0x1]
        %v1456 = vlaneseq
        %v1457 = vshrl.u32 %v1456, 7
        %v1458 = vsub.s32 0, %v1457
        %v1459 = vrot.slane %v1454, %v1458
        %v1461 = vmul.f32 %v1453, %v1459
        %v1462 = vld [vmem:[%s9] sm:$0x1]
        %v1464 = vlaneseq
        %v1465 = vshrl.u32 %v1464, 7
        %v1466 = vsub.s32 0, %v1465
        %v1467 = vrot.slane %v1462, %v1466
        %v1469 = vadd.f32 %v1461, %v1467
        %v1470 = vpack.c.bf16 %v1469, %v1469
        %v1471 = vld [vmem:[#allocation11] sm:$0xff]
        %v1472 = vld [vmem:[#allocation11 + $0x8] sm:$0xff]
        %v1473 = vld [vmem:[#allocation11 + $0x10] sm:$0xff]
        %v1474 = vld [vmem:[#allocation11 + $0x18] sm:$0xff]
        %v1475 = vld [vmem:[#allocation11 + $0x20] sm:$0xff]
        %v1476 = vld [vmem:[#allocation11 + $0x28] sm:$0xff]
        %v1477 = vld [vmem:[#allocation11 + $0x30] sm:$0xff]
        %v1478 = vld [vmem:[#allocation11 + $0x38] sm:$0xff]
        %v1479 = vld [vmem:[#allocation11 + $0x40] sm:$0xff]
        %v1480 = vld [vmem:[#allocation11 + $0x48] sm:$0xff]
        %v1481 = vld [vmem:[#allocation11 + $0x50] sm:$0xff]
        %v1482 = vld [vmem:[#allocation11 + $0x58] sm:$0xff]
        %v1483 = vld [vmem:[#allocation11 + $0x60] sm:$0xff]
        %v1484 = vld [vmem:[#allocation11 + $0x68] sm:$0xff]
        %v1485 = vld [vmem:[#allocation11 + $0x70] sm:$0xff]
        %v1486 = vld [vmem:[#allocation11 + $0x78] sm:$0xff]
        %v1487 = vld [vmem:[%s11] sm:$0x3]
        %v1489 = vlaneseq
        %v1490 = vshrl.u32 %v1489, 7
        %v1491 = vsub.s32 0, %v1490
        %v1492 = vrot.slane %v1487, %v1491
        %v1493 = vlaneseq
        %v1494 = vshrl.u32 %v1493, 7
        %v1495 = vsub.s32 1, %v1494
        %v1496 = vrot.slane %v1487, %v1495
        %v1515 = vunpack.c.l.b16 %v1471
        %v1516 = vunpack.c.h.b16 %v1471
        %v1517 = vunpack.c.l.b16 %v1472
        %v1518 = vunpack.c.h.b16 %v1472
        %v1519 = vunpack.c.l.b16 %v1473
        %v1520 = vunpack.c.h.b16 %v1473
        %v1521 = vunpack.c.l.b16 %v1474
        %v1522 = vunpack.c.h.b16 %v1474
        %v1523 = vunpack.c.l.b16 %v1475
        %v1524 = vunpack.c.h.b16 %v1475
        %v1525 = vunpack.c.l.b16 %v1476
        %v1526 = vunpack.c.h.b16 %v1476
        %v1527 = vunpack.c.l.b16 %v1477
        %v1528 = vunpack.c.h.b16 %v1477
        %v1529 = vunpack.c.l.b16 %v1478
        %v1530 = vunpack.c.h.b16 %v1478
        %v1531 = vunpack.c.l.b16 %v1479
        %v1532 = vunpack.c.h.b16 %v1479
        %v1533 = vunpack.c.l.b16 %v1480
        %v1534 = vunpack.c.h.b16 %v1480
        %v1535 = vunpack.c.l.b16 %v1481
        %v1536 = vunpack.c.h.b16 %v1481
        %v1537 = vunpack.c.l.b16 %v1482
        %v1538 = vunpack.c.h.b16 %v1482
        %v1539 = vunpack.c.l.b16 %v1483
        %v1540 = vunpack.c.h.b16 %v1483
        %v1541 = vunpack.c.l.b16 %v1484
        %v1542 = vunpack.c.h.b16 %v1484
        %v1543 = vunpack.c.l.b16 %v1485
        %v1544 = vunpack.c.h.b16 %v1485
        %v1545 = vunpack.c.l.b16 %v1486
        %v1546 = vunpack.c.h.b16 %v1486
        %v1547 = vpack.c.b16 %v1517, %v1515
        %v1548 = vpack.c.b16 %v1518, %v1516
        %v1549 = vpack.c.b16 %v1521, %v1519
        %v1550 = vpack.c.b16 %v1522, %v1520
        %v1551 = vpack.c.b16 %v1525, %v1523
        %v1552 = vpack.c.b16 %v1526, %v1524
        %v1553 = vpack.c.b16 %v1529, %v1527
        %v1554 = vpack.c.b16 %v1530, %v1528
        %v1555 = vpack.c.b16 %v1533, %v1531
        %v1556 = vpack.c.b16 %v1534, %v1532
        %v1557 = vpack.c.b16 %v1537, %v1535
        %v1558 = vpack.c.b16 %v1538, %v1536
        %v1559 = vpack.c.b16 %v1541, %v1539
        %v1560 = vpack.c.b16 %v1542, %v1540
        %v1561 = vpack.c.b16 %v1545, %v1543
        %v1562 = vpack.c.b16 %v1546, %v1544
        %1579 = vmatprep.subr.bf16.mxu0 %v1548
        %1580 = vmatpush1.bf16.msra.mxu0 %v1547
        %1581 = vmatprep.subr.bf16.mxu0 %v1550
        %1582 = vmatpush1.bf16.msra.mxu0 %v1549
        %1583 = vmatprep.subr.bf16.mxu0 %v1552
        %1584 = vmatpush1.bf16.msra.mxu0 %v1551
        %1585 = vmatprep.subr.bf16.mxu0 %v1554
        %1586 = vmatpush1.bf16.msra.mxu0 %v1553
        %1587 = vmatprep.subr.bf16.mxu0 %v1556
        %1588 = vmatpush1.bf16.msra.mxu0 %v1555
        %1589 = vmatprep.subr.bf16.mxu0 %v1558
        %1590 = vmatpush1.bf16.msra.mxu0 %v1557
        %1591 = vmatprep.subr.bf16.mxu0 %v1560
        %1592 = vmatpush1.bf16.msra.mxu0 %v1559
        %1593 = vmatprep.subr.bf16.mxu0 %v1562
        %1594 = vmatpush1.bf16.msra.mxu0 %v1561
        %1595 = vmatprep.subr.bf16.mxu0 0
        %1596 = vmatpush1.bf16.msra.mxu0 0
        %1597 = vmatprep.subr.bf16.mxu0 0
        %1598 = vmatpush1.bf16.msra.mxu0 0
        %1599 = vmatprep.subr.bf16.mxu0 0
        %1600 = vmatpush1.bf16.msra.mxu0 0
        %1601 = vmatprep.subr.bf16.mxu0 0
        %1602 = vmatpush1.bf16.msra.mxu0 0
        %1603 = vmatprep.subr.bf16.mxu0 0
        %1604 = vmatpush1.bf16.msra.mxu0 0
        %1605 = vmatprep.subr.bf16.mxu0 0
        %1606 = vmatpush1.bf16.msra.mxu0 0
        %1607 = vmatprep.subr.bf16.mxu0 0
        %1608 = vmatpush1.bf16.msra.mxu0 0
        %1609 = vmatprep.subr.bf16.mxu0 0
        %1610 = vmatpush1.bf16.msra.mxu0 0
        %1611 = vmatprep.mubr.bf16.mxu0 0
        %1612 = vmatmul.mubr.bf16.gmra.mrb[0].mxu0 %v1470
        %v1613 = vpop.f32.mrb[0].mxu0
        %v1614 = vadd.f32 %v1492, %v1613
        %v1615 = vpop.f32.mrb[0].mxu0
        %v1616 = vadd.f32 %v1496, %v1615
        %v1617 = vpop.f32.mrb[0].mxu0
        %v1618 = vpop.f32.mrb[0].mxu0
        %1619 = vdwg.mxu0
        %v1620 = vmax.f32 %v1614, 0.0
        %v1621 = vmax.f32 %v1616, 0.0
        %v1622 = vpack.c.bf16 %v1620, %v1620
        %v1623 = vpack.c.bf16 %v1621, %v1621
        %v1624 = vld [vmem:[#allocation12] sm:$0xf]
        %v1625 = vld [vmem:[#allocation12 + $0x4] sm:$0xf]
        %v1626 = vld [vmem:[#allocation12 + $0x8] sm:$0xf]
        %v1627 = vld [vmem:[#allocation12 + $0xc] sm:$0xf]
        %v1628 = vld [vmem:[#allocation12 + $0x10] sm:$0xf]
        %v1629 = vld [vmem:[#allocation12 + $0x14] sm:$0xf]
        %v1630 = vld [vmem:[#allocation12 + $0x18] sm:$0xf]
        %v1631 = vld [vmem:[#allocation12 + $0x1c] sm:$0xf]
        %v1632 = vld [vmem:[#allocation12 + $0x20] sm:$0xf]
        %v1633 = vld [vmem:[#allocation12 + $0x24] sm:$0xf]
        %v1634 = vld [vmem:[#allocation12 + $0x28] sm:$0xf]
        %v1635 = vld [vmem:[#allocation12 + $0x2c] sm:$0xf]
        %v1636 = vld [vmem:[#allocation12 + $0x30] sm:$0xf]
        %v1637 = vld [vmem:[#allocation12 + $0x34] sm:$0xf]
        %v1638 = vld [vmem:[#allocation12 + $0x38] sm:$0xf]
        %v1639 = vld [vmem:[#allocation12 + $0x3c] sm:$0xf]
        %v1640 = vld [vmem:[#allocation12 + $0x40] sm:$0xf]
        %v1641 = vld [vmem:[#allocation12 + $0x44] sm:$0xf]
        %v1642 = vld [vmem:[#allocation12 + $0x48] sm:$0xf]
        %v1643 = vld [vmem:[#allocation12 + $0x4c] sm:$0xf]
        %v1644 = vld [vmem:[#allocation12 + $0x50] sm:$0xf]
        %v1645 = vld [vmem:[#allocation12 + $0x54] sm:$0xf]
        %v1646 = vld [vmem:[#allocation12 + $0x58] sm:$0xf]
        %v1647 = vld [vmem:[#allocation12 + $0x5c] sm:$0xf]
        %v1648 = vld [vmem:[#allocation12 + $0x60] sm:$0xf]
        %v1649 = vld [vmem:[#allocation12 + $0x64] sm:$0xf]
        %v1650 = vld [vmem:[#allocation12 + $0x68] sm:$0xf]
        %v1651 = vld [vmem:[#allocation12 + $0x6c] sm:$0xf]
        %v1652 = vld [vmem:[#allocation12 + $0x70] sm:$0xf]
        %v1653 = vld [vmem:[#allocation12 + $0x74] sm:$0xf]
        %v1654 = vld [vmem:[#allocation12 + $0x78] sm:$0xf]
        %v1655 = vld [vmem:[#allocation12 + $0x7c] sm:$0xf]
        %v1656 = vld [vmem:[%s13] sm:$0x1]
        %v1658 = vlaneseq
        %v1659 = vshrl.u32 %v1658, 7
        %v1660 = vsub.s32 0, %v1659
        %v1661 = vrot.slane %v1656, %v1660
        %v1695 = vunpack.c.l.b16 %v1624
        %v1696 = vunpack.c.l.b16 %v1625
        %v1697 = vunpack.c.l.b16 %v1626
        %v1698 = vunpack.c.l.b16 %v1627
        %v1699 = vunpack.c.l.b16 %v1628
        %v1700 = vunpack.c.l.b16 %v1629
        %v1701 = vunpack.c.l.b16 %v1630
        %v1702 = vunpack.c.l.b16 %v1631
        %v1703 = vunpack.c.l.b16 %v1632
        %v1704 = vunpack.c.l.b16 %v1633
        %v1705 = vunpack.c.l.b16 %v1634
        %v1706 = vunpack.c.l.b16 %v1635
        %v1707 = vunpack.c.l.b16 %v1636
        %v1708 = vunpack.c.l.b16 %v1637
        %v1709 = vunpack.c.l.b16 %v1638
        %v1710 = vunpack.c.l.b16 %v1639
        %v1711 = vunpack.c.l.b16 %v1640
        %v1712 = vunpack.c.l.b16 %v1641
        %v1713 = vunpack.c.l.b16 %v1642
        %v1714 = vunpack.c.l.b16 %v1643
        %v1715 = vunpack.c.l.b16 %v1644
        %v1716 = vunpack.c.l.b16 %v1645
        %v1717 = vunpack.c.l.b16 %v1646
        %v1718 = vunpack.c.l.b16 %v1647
        %v1719 = vunpack.c.l.b16 %v1648
        %v1720 = vunpack.c.l.b16 %v1649
        %v1721 = vunpack.c.l.b16 %v1650
        %v1722 = vunpack.c.l.b16 %v1651
        %v1723 = vunpack.c.l.b16 %v1652
        %v1724 = vunpack.c.l.b16 %v1653
        %v1725 = vunpack.c.l.b16 %v1654
        %v1726 = vunpack.c.l.b16 %v1655
        %v1727 = vpack.c.b16 %v1696, %v1695
        %v1728 = vpack.c.b16 %v1698, %v1697
        %v1729 = vpack.c.b16 %v1700, %v1699
        %v1730 = vpack.c.b16 %v1702, %v1701
        %v1731 = vpack.c.b16 %v1704, %v1703
        %v1732 = vpack.c.b16 %v1706, %v1705
        %v1733 = vpack.c.b16 %v1708, %v1707
        %v1734 = vpack.c.b16 %v1710, %v1709
        %v1735 = vpack.c.b16 %v1712, %v1711
        %v1736 = vpack.c.b16 %v1714, %v1713
        %v1737 = vpack.c.b16 %v1716, %v1715
        %v1738 = vpack.c.b16 %v1718, %v1717
        %v1739 = vpack.c.b16 %v1720, %v1719
        %v1740 = vpack.c.b16 %v1722, %v1721
        %v1741 = vpack.c.b16 %v1724, %v1723
        %v1742 = vpack.c.b16 %v1726, %v1725
        %1759 = vmatprep.subr.bf16.mxu0 0
        %1760 = vmatpush1.bf16.msra.mxu0 %v1727
        %1761 = vmatprep.subr.bf16.mxu0 0
        %1762 = vmatpush1.bf16.msra.mxu0 %v1728
        %1763 = vmatprep.subr.bf16.mxu0 0
        %1764 = vmatpush1.bf16.msra.mxu0 %v1729
        %1765 = vmatprep.subr.bf16.mxu0 0
        %1766 = vmatpush1.bf16.msra.mxu0 %v1730
        %1767 = vmatprep.subr.bf16.mxu0 0
        %1768 = vmatpush1.bf16.msra.mxu0 %v1731
        %1769 = vmatprep.subr.bf16.mxu0 0
        %1770 = vmatpush1.bf16.msra.mxu0 %v1732
        %1771 = vmatprep.subr.bf16.mxu0 0
        %1772 = vmatpush1.bf16.msra.mxu0 %v1733
        %1773 = vmatprep.subr.bf16.mxu0 0
        %1774 = vmatpush1.bf16.msra.mxu0 %v1734
        %1775 = vmatprep.subr.bf16.mxu0 0
        %1776 = vmatpush1.bf16.msra.mxu0 %v1735
        %1777 = vmatprep.subr.bf16.mxu0 0
        %1778 = vmatpush1.bf16.msra.mxu0 %v1736
        %1779 = vmatprep.subr.bf16.mxu0 0
        %1780 = vmatpush1.bf16.msra.mxu0 %v1737
        %1781 = vmatprep.subr.bf16.mxu0 0
        %1782 = vmatpush1.bf16.msra.mxu0 %v1738
        %1783 = vmatprep.subr.bf16.mxu0 0
        %1784 = vmatpush1.bf16.msra.mxu0 %v1739
        %1785 = vmatprep.subr.bf16.mxu0 0
        %1786 = vmatpush1.bf16.msra.mxu0 %v1740
        %1787 = vmatprep.subr.bf16.mxu0 0
        %1788 = vmatpush1.bf16.msra.mxu0 %v1741
        %1789 = vmatprep.subr.bf16.mxu0 0
        %1790 = vmatpush1.bf16.msra.mxu0 %v1742
        %1791 = vmatprep.mubr.bf16.mxu0 %v1623
        %1792 = vmatmul.mubr.bf16.gmra.mrb[0].mxu0 %v1622
        %v1793 = vpop.f32.mrb[0].mxu0
        %v1794 = vadd.f32 %v1661, %v1793
        %v1795 = vpop.f32.mrb[0].mxu0
        %v1796 = vpop.f32.mrb[0].mxu0
        %v1797 = vpop.f32.mrb[0].mxu0
        %1798 = vdwg.mxu0
        %v1799 = vadd.f32 %v1442, %v1794
        %1800 = vst [vmem:[%s564] sm:$0xff] %v1799
        %s1801 = sand.u32 %s346, 1
        %s1802 = scalar_lea.sflag [#allocation5], %s1801
        %s1803 = sand.u32 %s346, 1
        %s1804 = smul.addr %s1803, 8
        %s1805 = scalar_lea.vmem [#allocation14], %s1804
        // Predicated region
        $region101: #{tpu_custom_call.1} parent=75 // pred_check
          %p1806 = pneg %p356
        $region102: #{tpu_custom_call.1} parent=75 // pred_check_branch
          %1808 = sbr.rel (%p1806) target = $region104
        $region103: #{tpu_custom_call.1} parent=75 // pred_region
          %s1810 = ssub.s32 128, 128
          %1811 = vsyncadd %s1802, %s1810
          %s1812 = smul.addr %s34, 128
          %s1813 = scalar_lea.hbm %s14, %s1812
          %s1815 = sshll.u32 %s1805, 4
          %s1816 = int_to_ptr.vmem [resolvable:$true] %s1815
          %1818 = dma.vmem_to_hbm [thread:$0]  %s1816, 128, %s1813, %s1802
        $region104: #{tpu_custom_call.1} parent=75 // pred_fallthru
          _
      $region76: #{tpu_custom_call.1} parent=5 // pred_fallthru
        _
      %p1819 = scmp.le.s32.totalorder 2, %s29
      // Predicated region
      $region105: #{tpu_custom_call.1} parent=5 // pred_check
        %p1820 = pneg %p1819
      $region106: #{tpu_custom_call.1} parent=5 // pred_check_branch
        %1822 = sbr.rel (%p1820) target = $region108
      $region107: #{tpu_custom_call.1} parent=5 // pred_region
        %s1823 = ssub.s32 %s29, 2
        // Predicated region
        $region109: #{tpu_custom_call.1} parent=107 // pred_check
          %p1824 = pneg %p362
        $region110: #{tpu_custom_call.1} parent=107 // pred_check_branch
          %1826 = sbr.rel (%p1824) target = $region112
        $region111: #{tpu_custom_call.1} parent=107 // pred_region
          %s1827 = sand.u32 %s347, 1
          %s1828 = scalar_lea.sflag [#allocation5], %s1827
          %s1829 = sand.u32 %s347, 1
          %s1830 = smul.addr %s1829, 8
          %s1831 = scalar_lea.vmem [#allocation14], %s1830
          %1832 = dma.done %s1828, 128
        $region112: #{tpu_custom_call.1} parent=107 // pred_fallthru
          _
      $region108: #{tpu_custom_call.1} parent=5 // pred_fallthru
        _
    $region6: #{tpu_custom_call.1} parent=1 // loop_footer
      %s33 = sadd.s32 1, %s29
    $region7: #{tpu_custom_call.1} parent=1 // loop_footer_branch
      %28 = sbr.rel target = $region3
    $region8: #{tpu_custom_call.1} parent=1 // loop_exit
      _
    %1833 = vsyncpa [#allocation4], 1
    %s1834 = scalar_lea.sflag [#allocation4], 1
    %1835 = vsyncpa %s1834, 1
    %1836 = vsyncpa [#allocation7], 1
    %1837 = vsyncpa [#allocation10], 1
    %1838 = vsyncpa [#allocation13], 1
    %1839 = vsyncpa [#allocation5], 1
    %s1840 = scalar_lea.sflag [#allocation5], 1
    %1841 = vsyncpa %s1840, 1

</llo_original>
